<compile_context>
chip_gen: v5e
topology: v5e:2x2
jax: 0.10.0
libtpu: 0.0.40
codegen_flags: <defaults>
</compile_context>

<pallas_src>
import functools

import jax
import jax.numpy as jnp
from jax.experimental import pallas as pl
from jax.experimental.pallas import tpu as pltpu

VMEM = pltpu.MemorySpace.VMEM
NEG_BIG = -1e30
LEAKY_SLOPE = 0.2


def _et_key(et):
    return '__'.join(et)


def _wcat_layout(nt, edge_types, heads, fout):
    """Column layout of the fused projection matrix for node type `nt`.

    Columns: [0, fout)  -> node-type projection (x @ W + b)
             then H cols per edge type with src == nt  (a_src scores)
             then H cols per edge type with dst == nt  (a_dst scores)
    Used identically on the host (build W_cat/b_cat) and in the kernel (slice
    the matmul result), so offsets always agree.
    """
    layout = {'proj': (0, fout)}
    off = fout
    for et in edge_types:
        if et[0] == nt:
            layout[('src', et)] = (off, off + heads)
            off += heads
    for et in edge_types:
        if et[2] == nt:
            layout[('dst', et)] = (off, off + heads)
            off += heads
    layout['total'] = off
    return layout


# --------------------------------------------------------------------------
# Fully fused 2-layer HAN kernel
# --------------------------------------------------------------------------
def _han2_kernel(*refs, nts, ets, l1_dsts, l2_nts, l2_ets, l2_dsts, out_nts,
                 heads, hidden_channels, out_channels):
    it = iter(refs)
    x_refs = {nt: next(it) for nt in nts}
    adj_refs = {et: next(it) for et in ets}
    l1_wrefs = {nt: (next(it), next(it)) for nt in nts}
    l1_sem = (next(it), next(it), next(it))
    l2_wrefs = {nt: (next(it), next(it)) for nt in l2_nts}
    l2_sem = (next(it), next(it), next(it))
    out_refs = {nt: next(it) for nt in out_nts}

    # Additive attention bias + empty-row indicator: built ONCE per edge type,
    # reused by both layers and every head.
    adj_bias, has_edge = {}, {}
    for et in ets:
        adj = adj_refs[et][...]                          # (Nd, Ns) 0/1 f32
        adj_bias[et] = jnp.where(adj > 0.0, 0.0, NEG_BIG)
        deg = jnp.sum(adj, axis=-1, keepdims=True)       # (Nd, 1)
        has_edge[et] = jnp.where(deg > 0.0, 1.0, 0.0)

    def run_layer(x_vals, wrefs, sem_refs, layer_ets, layer_dsts, fout):
        head_dim = fout // heads
        kw = sem_refs[0][...]                            # (F, F)
        kb = sem_refs[1][...]                            # (1, F)
        qv = sem_refs[2][...]                            # (F, 1)

        # 1) one wide lane-dense matmul per node type: projection + every
        #    per-edge-type a_src / a_dst score column (folded on the host).
        xw_all, layouts, proj_bf = {}, {}, {}
        for nt, xv in x_vals.items():
            layouts[nt] = _wcat_layout(nt, layer_ets, heads, fout)
            w_ref, b_ref = wrefs[nt]
            xw = jnp.dot(xv.astype(jnp.bfloat16), w_ref[...],
                         preferred_element_type=jnp.float32) + b_ref[...]
            xw_all[nt] = xw
            proj_bf[nt] = xw[:, :fout].astype(jnp.bfloat16)

        # 2) per-edge-type masked attention + aggregation + relu
        per_dst = {nt: [] for nt in layer_dsts}
        for et in layer_ets:
            src, _, dst = et
            s0, s1 = layouts[src][('src', et)]
            d0, d1 = layouts[dst][('dst', et)]
            a_s_t = xw_all[src][:, s0:s1].T              # (H, Ns): 1 transpose/et
            a_d = xw_all[dst][:, d0:d1]                  # (Nd, H)
            bias = adj_bias[et]
            xs_bf = proj_bf[src]
            head_outs = []
            for h in range(heads):                       # heads=4, static
                e = a_d[:, h:h + 1] + a_s_t[h:h + 1, :]  # (Nd, Ns)
                e = jnp.maximum(e, LEAKY_SLOPE * e) + bias  # leaky_relu + mask
                m = jnp.max(e, axis=-1, keepdims=True)
                p = jnp.exp(e - m)                       # masked entries -> exact 0
                inv = pl.reciprocal(jnp.sum(p, axis=-1, keepdims=True),
                                    approx=True)         # (Nd, 1), EUP slot
                head_outs.append(
                    jnp.dot(p.astype(jnp.bfloat16),
                            xs_bf[:, h * head_dim:(h + 1) * head_dim],
                            preferred_element_type=jnp.float32) * inv)
            out_et = jnp.maximum(jnp.concatenate(head_outs, axis=-1), 0.0)
            per_dst[dst].append(out_et * has_edge[et])    # rows w/o edges -> 0

        # 3) semantic (edge-type level) attention
        result = {}
        for nt in layer_dsts:
            outs = per_dst[nt]
            scores = []
            for o in outs:
                k = jnp.tanh(jnp.dot(o, kw, preferred_element_type=jnp.float32) + kb)
                mk = jnp.mean(k, axis=0, keepdims=True)   # (1, F) mean over nodes
                scores.append(jnp.dot(mk, qv, preferred_element_type=jnp.float32))
            mx = scores[0]
            for s in scores[1:]:
                mx = jnp.maximum(mx, s)
            ws = [jnp.exp(s - mx) for s in scores]
            tot = ws[0]
            for w in ws[1:]:
                tot = tot + w
            inv = 1.0 / tot
            res = (ws[0] * inv) * outs[0]
            for o, w in zip(outs[1:], ws[1:]):
                res = res + (w * inv) * o
            result[nt] = res
        return result

    # layer 1 -> layer 2 entirely in VMEM / registers (no HBM round trip)
    x_vals = {nt: x_refs[nt][...] for nt in nts}
    h1 = run_layer(x_vals, l1_wrefs, l1_sem, ets, l1_dsts, hidden_channels)
    h2 = run_layer({nt: h1[nt] for nt in l2_nts}, l2_wrefs, l2_sem,
                   l2_ets, l2_dsts, out_channels)
    for nt in out_nts:
        out_refs[nt][...] = h2[nt]                        # one lane-dense store


# --------------------------------------------------------------------------
# Host-side parameter preparation (fold attention vectors into the projection)
# --------------------------------------------------------------------------
def _block_diag(att):
    # (H, D) attention vector -> (H*D, H) block-diagonal matrix so that
    # (N, H*D) @ (H*D, H) == per-head (x_h * att_h).sum(-1)
    h, d = att.shape
    eye = jnp.eye(h, dtype=att.dtype)
    return (att[:, :, None] * eye[:, None, :]).reshape(h * d, h)


def _prepare_layer(lparams, node_list, edge_list, heads, fout):
    wcat, bcat = {}, {}
    for nt in node_list:
        W = lparams['proj'][nt]['w']
        b = lparams['proj'][nt]['b']
        cols_w, cols_b = [W], [b]
        for et in edge_list:
            if et[0] == nt:
                bd = _block_diag(lparams['att_src'][_et_key(et)])
                cols_w.append(W @ bd)
                cols_b.append(b @ bd)
        for et in edge_list:
            if et[2] == nt:
                bd = _block_diag(lparams['att_dst'][_et_key(et)])
                cols_w.append(W @ bd)
                cols_b.append(b @ bd)
        wcat[nt] = jnp.concatenate(cols_w, axis=1).astype(jnp.bfloat16)
        bcat[nt] = jnp.concatenate(cols_b, axis=0).reshape(1, -1).astype(jnp.float32)
    return {
        'wcat': wcat, 'bcat': bcat,
        'k_w': lparams['k_lin_w'],
        'k_b': lparams['k_lin_b'].reshape(1, -1),
        'q': lparams['q'].reshape(-1, 1),
    }


# --------------------------------------------------------------------------
# Parameter init (deterministic, synthetic)
# --------------------------------------------------------------------------
def _init_linear(key, fin, fout, scale=0.1):
    kw, kb = jax.random.split(key)
    return {'w': scale * jax.random.normal(kw, (fin, fout), jnp.float32),
            'b': scale * jax.random.normal(kb, (fout,), jnp.float32)}


def init_han_conv(key, fin, fout, metadata, heads):
    node_types, edge_types = metadata
    d = fout // heads
    keys = jax.random.split(key, 4)
    params = {'proj': {}, 'att_src': {}, 'att_dst': {}}
    for i, nt in enumerate(node_types):
        params['proj'][nt] = _init_linear(jax.random.fold_in(keys[0], i), fin, fout)
    for i, et in enumerate(edge_types):
        ek = _et_key(et)
        k1, k2 = jax.random.split(jax.random.fold_in(keys[1], i))
        params['att_src'][ek] = 0.1 * jax.random.normal(k1, (heads, d), jnp.float32)
        params['att_dst'][ek] = 0.1 * jax.random.normal(k2, (heads, d), jnp.float32)
    kl = _init_linear(keys[2], fout, fout)
    params['k_lin_w'] = kl['w']
    params['k_lin_b'] = kl['b']
    params['q'] = 0.1 * jax.random.normal(keys[3], (fout,), jnp.float32)
    return params


# --------------------------------------------------------------------------
# HAN forward: ONE fused Pallas call for both HANConv layers
# --------------------------------------------------------------------------
def han_forward(params, x_dict, adj_dict, metadata, hidden_channels,
                out_channels, heads=4, out_node_type='author'):
    node_types, edge_types = metadata

    # node / edge types that actually participate
    nts = tuple(nt for nt in node_types if x_dict.get(nt) is not None)
    # TODO(synk): edge types whose endpoints have no features are skipped here
    # (PyG would raise); none occur in this metadata.
    ets = tuple(et for et in edge_types if et[0] in nts and et[2] in nts)
    l1_dsts = tuple(nt for nt in node_types if any(et[2] == nt for et in ets))
    l2_nts = l1_dsts                                   # layer-2 inputs = layer-1 outs
    l2_ets = tuple(et for et in ets if et[0] in l2_nts and et[2] in l2_nts)
    l2_dsts = tuple(nt for nt in node_types if any(et[2] == nt for et in l2_ets))
    out_nts = (out_node_type,)
    assert out_node_type in l2_dsts

    prep1 = _prepare_layer(params['conv1'], nts, ets, heads, hidden_channels)
    prep2 = _prepare_layer(params['conv2'], l2_nts, l2_ets, heads, out_channels)

    inputs = []
    for nt in nts:
        inputs.append(x_dict[nt])
    for et in ets:
        inputs.append(adj_dict[et])      # TODO(synk): int8/bitmask adjacency at scale
    for nt in nts:
        inputs += [prep1['wcat'][nt], prep1['bcat'][nt]]
    inputs += [prep1['k_w'], prep1['k_b'], prep1['q']]
    for nt in l2_nts:
        inputs += [prep2['wcat'][nt], prep2['bcat'][nt]]
    inputs += [prep2['k_w'], prep2['k_b'], prep2['q']]

    out_shape = tuple(
        jax.ShapeDtypeStruct((x_dict[nt].shape[0], out_channels), jnp.float32)
        for nt in out_nts)

    kern = functools.partial(
        _han2_kernel, nts=nts, ets=ets, l1_dsts=l1_dsts, l2_nts=l2_nts,
        l2_ets=l2_ets, l2_dsts=l2_dsts, out_nts=out_nts, heads=heads,
        hidden_channels=hidden_channels, out_channels=out_channels)

    outs = pl.pallas_call(
        kern,
        out_shape=out_shape,
        in_specs=[pl.BlockSpec(memory_space=VMEM) for _ in inputs],
        out_specs=tuple(pl.BlockSpec(memory_space=VMEM) for _ in out_nts),
        compiler_params=pltpu.CompilerParams(vmem_limit_bytes=32 * 1024 * 1024),
    )(*inputs)

    return outs[0]


# --------------------------------------------------------------------------
if __name__ == "__main__":
    # synthetic heterogeneous graph metadata (DBLP-like)
    node_types = ['author', 'paper']
    edge_types = [
        ('author', 'writes', 'paper'),
        ('paper', 'written_by', 'author'),
        ('paper', 'cites', 'paper'),
    ]
    metadata = (node_types, edge_types)

    n_author, n_paper = 8, 12
    in_channels, hidden_channels, out_channels, heads = 16, 32, 8, 4

    key = jax.random.PRNGKey(0)
    kx_a, kx_p, ka1, ka2, ka3, kp1, kp2 = jax.random.split(key, 7)

    x_dict = {
        'author': jax.random.normal(kx_a, (n_author, in_channels), jnp.float32),
        'paper': jax.random.normal(kx_p, (n_paper, in_channels), jnp.float32),
    }

    num_nodes = {'author': n_author, 'paper': n_paper}
    adj_dict = {}
    for k, et in zip([ka1, ka2, ka3], edge_types):
        src, _, dst = et
        adj_dict[et] = jax.random.bernoulli(
            k, 0.5, (num_nodes[dst], num_nodes[src])).astype(jnp.float32)

    params = {
        'conv1': init_han_conv(kp1, in_channels, hidden_channels, metadata, heads),
        'conv2': init_han_conv(kp2, hidden_channels, out_channels, metadata, heads),
    }

    out = han_forward(params, x_dict, adj_dict, metadata,
                      hidden_channels, out_channels, heads,
                      out_node_type='author')
    out = jax.block_until_ready(out)

    assert out.shape == (n_author, out_channels), out.shape
    assert bool(jnp.all(jnp.isfinite(out)))
    print("KERNEL_OK")
</pallas_src>

<mosaic_0001>
module attributes {stable_mosaic.version = 11 : i64} {
  func.func @_han2_kernel(%arg0: memref<8x16xf32, #tpu.memory_space<vmem>>, %arg1: memref<12x16xf32, #tpu.memory_space<vmem>>, %arg2: memref<12x8xf32, #tpu.memory_space<vmem>>, %arg3: memref<8x12xf32, #tpu.memory_space<vmem>>, %arg4: memref<12x12xf32, #tpu.memory_space<vmem>>, %arg5: memref<16x40xbf16, #tpu.memory_space<vmem>>, %arg6: memref<1x40xf32, #tpu.memory_space<vmem>>, %arg7: memref<16x48xbf16, #tpu.memory_space<vmem>>, %arg8: memref<1x48xf32, #tpu.memory_space<vmem>>, %arg9: memref<32x32xf32, #tpu.memory_space<vmem>>, %arg10: memref<1x32xf32, #tpu.memory_space<vmem>>, %arg11: memref<32x1xf32, #tpu.memory_space<vmem>>, %arg12: memref<32x16xbf16, #tpu.memory_space<vmem>>, %arg13: memref<1x16xf32, #tpu.memory_space<vmem>>, %arg14: memref<32x24xbf16, #tpu.memory_space<vmem>>, %arg15: memref<1x24xf32, #tpu.memory_space<vmem>>, %arg16: memref<8x8xf32, #tpu.memory_space<vmem>>, %arg17: memref<1x8xf32, #tpu.memory_space<vmem>>, %arg18: memref<8x1xf32, #tpu.memory_space<vmem>>, %arg19: memref<8x8xf32, #tpu.memory_space<vmem>>) attributes {dimension_semantics = [], scalar_prefetch = 0 : i64, scratch_operands = 0 : i64, tpu.core_type = #tpu.core_type<tc>} {
    %c0 = arith.constant 0 : index
    %c0_0 = arith.constant 0 : index
    %0 = vector.load %arg2[%c0, %c0_0] : memref<12x8xf32, #tpu.memory_space<vmem>>, vector<12x8xf32>
    %cst = arith.constant 0.000000e+00 : f32
    %1 = vector.broadcast %cst : f32 to vector<12x8xf32>
    %2 = arith.cmpf ogt, %0, %1 : vector<12x8xf32>
    %cst_1 = arith.constant 0.000000e+00 : f32
    %cst_2 = arith.constant -1.000000e+30 : f32
    %3 = vector.broadcast %cst_1 : f32 to vector<12x8xf32>
    %4 = vector.broadcast %cst_2 : f32 to vector<12x8xf32>
    %5 = arith.select %2, %3, %4 : vector<12x8xi1>, vector<12x8xf32>
    %cst_3 = arith.constant dense<0.000000e+00> : vector<12xf32>
    %6 = vector.multi_reduction <add>, %0, %cst_3 [1] : vector<12x8xf32> to vector<12xf32>
    %7 = vector.shape_cast %6 : vector<12xf32> to vector<12x1xf32>
    %cst_4 = arith.constant 0.000000e+00 : f32
    %8 = vector.broadcast %cst_4 : f32 to vector<12x1xf32>
    %9 = arith.cmpf ogt, %7, %8 : vector<12x1xf32>
    %cst_5 = arith.constant 1.000000e+00 : f32
    %cst_6 = arith.constant 0.000000e+00 : f32
    %10 = vector.broadcast %cst_5 : f32 to vector<12x1xf32>
    %11 = vector.broadcast %cst_6 : f32 to vector<12x1xf32>
    %12 = arith.select %9, %10, %11 : vector<12x1xi1>, vector<12x1xf32>
    %c0_7 = arith.constant 0 : index
    %c0_8 = arith.constant 0 : index
    %13 = vector.load %arg3[%c0_7, %c0_8] : memref<8x12xf32, #tpu.memory_space<vmem>>, vector<8x12xf32>
    %cst_9 = arith.constant 0.000000e+00 : f32
    %14 = vector.broadcast %cst_9 : f32 to vector<8x12xf32>
    %15 = arith.cmpf ogt, %13, %14 : vector<8x12xf32>
    %cst_10 = arith.constant 0.000000e+00 : f32
    %cst_11 = arith.constant -1.000000e+30 : f32
    %16 = vector.broadcast %cst_10 : f32 to vector<8x12xf32>
    %17 = vector.broadcast %cst_11 : f32 to vector<8x12xf32>
    %18 = arith.select %15, %16, %17 : vector<8x12xi1>, vector<8x12xf32>
    %cst_12 = arith.constant dense<0.000000e+00> : vector<8xf32>
    %19 = vector.multi_reduction <add>, %13, %cst_12 [1] : vector<8x12xf32> to vector<8xf32>
    %20 = vector.shape_cast %19 : vector<8xf32> to vector<8x1xf32>
    %cst_13 = arith.constant 0.000000e+00 : f32
    %21 = vector.broadcast %cst_13 : f32 to vector<8x1xf32>
    %22 = arith.cmpf ogt, %20, %21 : vector<8x1xf32>
    %cst_14 = arith.constant 1.000000e+00 : f32
    %cst_15 = arith.constant 0.000000e+00 : f32
    %23 = vector.broadcast %cst_14 : f32 to vector<8x1xf32>
    %24 = vector.broadcast %cst_15 : f32 to vector<8x1xf32>
    %25 = arith.select %22, %23, %24 : vector<8x1xi1>, vector<8x1xf32>
    %c0_16 = arith.constant 0 : index
    %c0_17 = arith.constant 0 : index
    %26 = vector.load %arg4[%c0_16, %c0_17] : memref<12x12xf32, #tpu.memory_space<vmem>>, vector<12x12xf32>
    %cst_18 = arith.constant 0.000000e+00 : f32
    %27 = vector.broadcast %cst_18 : f32 to vector<12x12xf32>
    %28 = arith.cmpf ogt, %26, %27 : vector<12x12xf32>
    %cst_19 = arith.constant 0.000000e+00 : f32
    %cst_20 = arith.constant -1.000000e+30 : f32
    %29 = vector.broadcast %cst_19 : f32 to vector<12x12xf32>
    %30 = vector.broadcast %cst_20 : f32 to vector<12x12xf32>
    %31 = arith.select %28, %29, %30 : vector<12x12xi1>, vector<12x12xf32>
    %cst_21 = arith.constant dense<0.000000e+00> : vector<12xf32>
    %32 = vector.multi_reduction <add>, %26, %cst_21 [1] : vector<12x12xf32> to vector<12xf32>
    %33 = vector.shape_cast %32 : vector<12xf32> to vector<12x1xf32>
    %cst_22 = arith.constant 0.000000e+00 : f32
    %34 = vector.broadcast %cst_22 : f32 to vector<12x1xf32>
    %35 = arith.cmpf ogt, %33, %34 : vector<12x1xf32>
    %cst_23 = arith.constant 1.000000e+00 : f32
    %cst_24 = arith.constant 0.000000e+00 : f32
    %36 = vector.broadcast %cst_23 : f32 to vector<12x1xf32>
    %37 = vector.broadcast %cst_24 : f32 to vector<12x1xf32>
    %38 = arith.select %35, %36, %37 : vector<12x1xi1>, vector<12x1xf32>
    %c0_25 = arith.constant 0 : index
    %c0_26 = arith.constant 0 : index
    %39 = vector.load %arg0[%c0_25, %c0_26] : memref<8x16xf32, #tpu.memory_space<vmem>>, vector<8x16xf32>
    %c0_27 = arith.constant 0 : index
    %c0_28 = arith.constant 0 : index
    %40 = vector.load %arg1[%c0_27, %c0_28] : memref<12x16xf32, #tpu.memory_space<vmem>>, vector<12x16xf32>
    %c0_29 = arith.constant 0 : index
    %c0_30 = arith.constant 0 : index
    %41 = vector.load %arg9[%c0_29, %c0_30] : memref<32x32xf32, #tpu.memory_space<vmem>>, vector<32x32xf32>
    %c0_31 = arith.constant 0 : index
    %c0_32 = arith.constant 0 : index
    %42 = vector.load %arg10[%c0_31, %c0_32] : memref<1x32xf32, #tpu.memory_space<vmem>>, vector<1x32xf32>
    %c0_33 = arith.constant 0 : index
    %c0_34 = arith.constant 0 : index
    %43 = vector.load %arg11[%c0_33, %c0_34] : memref<32x1xf32, #tpu.memory_space<vmem>>, vector<32x1xf32>
    %44 = arith.truncf %39 : vector<8x16xf32> to vector<8x16xbf16>
    %c0_35 = arith.constant 0 : index
    %c0_36 = arith.constant 0 : index
    %45 = vector.load %arg5[%c0_35, %c0_36] : memref<16x40xbf16, #tpu.memory_space<vmem>>, vector<16x40xbf16>
    %cst_37 = arith.constant dense<0.000000e+00> : vector<8x40xf32>
    %46 = tpu.matmul %44, %45, %cst_37 {dimension_numbers = #tpu.dot_dimension_numbers<[1], [0], [0], [1], [0, 0, 1, 1], [], []>} : vector<8x16xbf16>, vector<16x40xbf16>, vector<8x40xf32> -> vector<8x40xf32>
    %c0_38 = arith.constant 0 : index
    %c0_39 = arith.constant 0 : index
    %47 = vector.load %arg6[%c0_38, %c0_39] : memref<1x40xf32, #tpu.memory_space<vmem>>, vector<1x40xf32>
    %48 = vector.broadcast %47 : vector<1x40xf32> to vector<8x40xf32>
    %49 = arith.addf %46, %48 : vector<8x40xf32>
    %50 = vector.extract_strided_slice %49 {offsets = [0, 0], sizes = [8, 32], strides = [1, 1]} : vector<8x40xf32> to vector<8x32xf32>
    %51 = arith.truncf %50 : vector<8x32xf32> to vector<8x32xbf16>
    %52 = arith.truncf %40 : vector<12x16xf32> to vector<12x16xbf16>
    %c0_40 = arith.constant 0 : index
    %c0_41 = arith.constant 0 : index
    %53 = vector.load %arg7[%c0_40, %c0_41] : memref<16x48xbf16, #tpu.memory_space<vmem>>, vector<16x48xbf16>
    %cst_42 = arith.constant dense<0.000000e+00> : vector<12x48xf32>
    %54 = tpu.matmul %52, %53, %cst_42 {dimension_numbers = #tpu.dot_dimension_numbers<[1], [0], [0], [1], [0, 0, 1, 1], [], []>} : vector<12x16xbf16>, vector<16x48xbf16>, vector<12x48xf32> -> vector<12x48xf32>
    %c0_43 = arith.constant 0 : index
    %c0_44 = arith.constant 0 : index
    %55 = vector.load %arg8[%c0_43, %c0_44] : memref<1x48xf32, #tpu.memory_space<vmem>>, vector<1x48xf32>
    %56 = vector.broadcast %55 : vector<1x48xf32> to vector<12x48xf32>
    %57 = arith.addf %54, %56 : vector<12x48xf32>
    %58 = vector.extract_strided_slice %57 {offsets = [0, 0], sizes = [12, 32], strides = [1, 1]} : vector<12x48xf32> to vector<12x32xf32>
    %59 = arith.truncf %58 : vector<12x32xf32> to vector<12x32xbf16>
    %60 = vector.extract_strided_slice %49 {offsets = [0, 32], sizes = [8, 4], strides = [1, 1]} : vector<8x40xf32> to vector<8x4xf32>
    %61 = tpu.transpose %60, [1, 0] : vector<8x4xf32> -> vector<4x8xf32>
    %62 = vector.extract_strided_slice %57 {offsets = [0, 40], sizes = [12, 4], strides = [1, 1]} : vector<12x48xf32> to vector<12x4xf32>
    %63 = vector.extract_strided_slice %62 {offsets = [0, 0], sizes = [12, 1], strides = [1, 1]} : vector<12x4xf32> to vector<12x1xf32>
    %64 = vector.extract_strided_slice %61 {offsets = [0, 0], sizes = [1, 8], strides = [1, 1]} : vector<4x8xf32> to vector<1x8xf32>
    %65 = vector.broadcast %63 : vector<12x1xf32> to vector<12x8xf32>
    %66 = vector.broadcast %64 : vector<1x8xf32> to vector<12x8xf32>
    %67 = arith.addf %65, %66 : vector<12x8xf32>
    %cst_45 = arith.constant 2.000000e-01 : f32
    %68 = vector.broadcast %cst_45 : f32 to vector<12x8xf32>
    %69 = arith.mulf %68, %67 : vector<12x8xf32>
    %70 = arith.maximumf %67, %69 : vector<12x8xf32>
    %71 = arith.addf %70, %5 : vector<12x8xf32>
    %cst_46 = arith.constant dense<0xFF800000> : vector<12xf32>
    %72 = vector.multi_reduction <maximumf>, %71, %cst_46 [1] : vector<12x8xf32> to vector<12xf32>
    %73 = vector.shape_cast %72 : vector<12xf32> to vector<12x1xf32>
    %74 = vector.broadcast %73 : vector<12x1xf32> to vector<12x8xf32>
    %75 = arith.subf %71, %74 : vector<12x8xf32>
    %76 = math.exp %75 : vector<12x8xf32>
    %cst_47 = arith.constant dense<0.000000e+00> : vector<12xf32>
    %77 = vector.multi_reduction <add>, %76, %cst_47 [1] : vector<12x8xf32> to vector<12xf32>
    %78 = vector.shape_cast %77 : vector<12xf32> to vector<12x1xf32>
    %79 = tpu.reciprocal %78 {approx = true} : vector<12x1xf32> -> vector<12x1xf32>
    %80 = arith.truncf %76 : vector<12x8xf32> to vector<12x8xbf16>
    %81 = vector.extract_strided_slice %51 {offsets = [0, 0], sizes = [8, 8], strides = [1, 1]} : vector<8x32xbf16> to vector<8x8xbf16>
    %cst_48 = arith.constant dense<0.000000e+00> : vector<12x8xf32>
    %82 = tpu.matmul %80, %81, %cst_48 {dimension_numbers = #tpu.dot_dimension_numbers<[1], [0], [0], [1], [0, 0, 1, 1], [], []>} : vector<12x8xbf16>, vector<8x8xbf16>, vector<12x8xf32> -> vector<12x8xf32>
    %83 = vector.broadcast %79 : vector<12x1xf32> to vector<12x8xf32>
    %84 = arith.mulf %82, %83 : vector<12x8xf32>
    %85 = vector.extract_strided_slice %62 {offsets = [0, 1], sizes = [12, 1], strides = [1, 1]} : vector<12x4xf32> to vector<12x1xf32>
    %86 = vector.extract_strided_slice %61 {offsets = [1, 0], sizes = [1, 8], strides = [1, 1]} : vector<4x8xf32> to vector<1x8xf32>
    %87 = vector.broadcast %85 : vector<12x1xf32> to vector<12x8xf32>
    %88 = vector.broadcast %86 : vector<1x8xf32> to vector<12x8xf32>
    %89 = arith.addf %87, %88 : vector<12x8xf32>
    %cst_49 = arith.constant 2.000000e-01 : f32
    %90 = vector.broadcast %cst_49 : f32 to vector<12x8xf32>
    %91 = arith.mulf %90, %89 : vector<12x8xf32>
    %92 = arith.maximumf %89, %91 : vector<12x8xf32>
    %93 = arith.addf %92, %5 : vector<12x8xf32>
    %cst_50 = arith.constant dense<0xFF800000> : vector<12xf32>
    %94 = vector.multi_reduction <maximumf>, %93, %cst_50 [1] : vector<12x8xf32> to vector<12xf32>
    %95 = vector.shape_cast %94 : vector<12xf32> to vector<12x1xf32>
    %96 = vector.broadcast %95 : vector<12x1xf32> to vector<12x8xf32>
    %97 = arith.subf %93, %96 : vector<12x8xf32>
    %98 = math.exp %97 : vector<12x8xf32>
    %cst_51 = arith.constant dense<0.000000e+00> : vector<12xf32>
    %99 = vector.multi_reduction <add>, %98, %cst_51 [1] : vector<12x8xf32> to vector<12xf32>
    %100 = vector.shape_cast %99 : vector<12xf32> to vector<12x1xf32>
    %101 = tpu.reciprocal %100 {approx = true} : vector<12x1xf32> -> vector<12x1xf32>
    %102 = arith.truncf %98 : vector<12x8xf32> to vector<12x8xbf16>
    %103 = vector.extract_strided_slice %51 {offsets = [0, 8], sizes = [8, 8], strides = [1, 1]} : vector<8x32xbf16> to vector<8x8xbf16>
    %cst_52 = arith.constant dense<0.000000e+00> : vector<12x8xf32>
    %104 = tpu.matmul %102, %103, %cst_52 {dimension_numbers = #tpu.dot_dimension_numbers<[1], [0], [0], [1], [0, 0, 1, 1], [], []>} : vector<12x8xbf16>, vector<8x8xbf16>, vector<12x8xf32> -> vector<12x8xf32>
    %105 = vector.broadcast %101 : vector<12x1xf32> to vector<12x8xf32>
    %106 = arith.mulf %104, %105 : vector<12x8xf32>
    %107 = vector.extract_strided_slice %62 {offsets = [0, 2], sizes = [12, 1], strides = [1, 1]} : vector<12x4xf32> to vector<12x1xf32>
    %108 = vector.extract_strided_slice %61 {offsets = [2, 0], sizes = [1, 8], strides = [1, 1]} : vector<4x8xf32> to vector<1x8xf32>
    %109 = vector.broadcast %107 : vector<12x1xf32> to vector<12x8xf32>
    %110 = vector.broadcast %108 : vector<1x8xf32> to vector<12x8xf32>
    %111 = arith.addf %109, %110 : vector<12x8xf32>
    %cst_53 = arith.constant 2.000000e-01 : f32
    %112 = vector.broadcast %cst_53 : f32 to vector<12x8xf32>
    %113 = arith.mulf %112, %111 : vector<12x8xf32>
    %114 = arith.maximumf %111, %113 : vector<12x8xf32>
    %115 = arith.addf %114, %5 : vector<12x8xf32>
    %cst_54 = arith.constant dense<0xFF800000> : vector<12xf32>
    %116 = vector.multi_reduction <maximumf>, %115, %cst_54 [1] : vector<12x8xf32> to vector<12xf32>
    %117 = vector.shape_cast %116 : vector<12xf32> to vector<12x1xf32>
    %118 = vector.broadcast %117 : vector<12x1xf32> to vector<12x8xf32>
    %119 = arith.subf %115, %118 : vector<12x8xf32>
    %120 = math.exp %119 : vector<12x8xf32>
    %cst_55 = arith.constant dense<0.000000e+00> : vector<12xf32>
    %121 = vector.multi_reduction <add>, %120, %cst_55 [1] : vector<12x8xf32> to vector<12xf32>
    %122 = vector.shape_cast %121 : vector<12xf32> to vector<12x1xf32>
    %123 = tpu.reciprocal %122 {approx = true} : vector<12x1xf32> -> vector<12x1xf32>
    %124 = arith.truncf %120 : vector<12x8xf32> to vector<12x8xbf16>
    %125 = vector.extract_strided_slice %51 {offsets = [0, 16], sizes = [8, 8], strides = [1, 1]} : vector<8x32xbf16> to vector<8x8xbf16>
    %cst_56 = arith.constant dense<0.000000e+00> : vector<12x8xf32>
    %126 = tpu.matmul %124, %125, %cst_56 {dimension_numbers = #tpu.dot_dimension_numbers<[1], [0], [0], [1], [0, 0, 1, 1], [], []>} : vector<12x8xbf16>, vector<8x8xbf16>, vector<12x8xf32> -> vector<12x8xf32>
    %127 = vector.broadcast %123 : vector<12x1xf32> to vector<12x8xf32>
    %128 = arith.mulf %126, %127 : vector<12x8xf32>
    %129 = vector.extract_strided_slice %62 {offsets = [0, 3], sizes = [12, 1], strides = [1, 1]} : vector<12x4xf32> to vector<12x1xf32>
    %130 = vector.extract_strided_slice %61 {offsets = [3, 0], sizes = [1, 8], strides = [1, 1]} : vector<4x8xf32> to vector<1x8xf32>
    %131 = vector.broadcast %129 : vector<12x1xf32> to vector<12x8xf32>
    %132 = vector.broadcast %130 : vector<1x8xf32> to vector<12x8xf32>
    %133 = arith.addf %131, %132 : vector<12x8xf32>
    %cst_57 = arith.constant 2.000000e-01 : f32
    %134 = vector.broadcast %cst_57 : f32 to vector<12x8xf32>
    %135 = arith.mulf %134, %133 : vector<12x8xf32>
    %136 = arith.maximumf %133, %135 : vector<12x8xf32>
    %137 = arith.addf %136, %5 : vector<12x8xf32>
    %cst_58 = arith.constant dense<0xFF800000> : vector<12xf32>
    %138 = vector.multi_reduction <maximumf>, %137, %cst_58 [1] : vector<12x8xf32> to vector<12xf32>
    %139 = vector.shape_cast %138 : vector<12xf32> to vector<12x1xf32>
    %140 = vector.broadcast %139 : vector<12x1xf32> to vector<12x8xf32>
    %141 = arith.subf %137, %140 : vector<12x8xf32>
    %142 = math.exp %141 : vector<12x8xf32>
    %cst_59 = arith.constant dense<0.000000e+00> : vector<12xf32>
    %143 = vector.multi_reduction <add>, %142, %cst_59 [1] : vector<12x8xf32> to vector<12xf32>
    %144 = vector.shape_cast %143 : vector<12xf32> to vector<12x1xf32>
    %145 = tpu.reciprocal %144 {approx = true} : vector<12x1xf32> -> vector<12x1xf32>
    %146 = arith.truncf %142 : vector<12x8xf32> to vector<12x8xbf16>
    %147 = vector.extract_strided_slice %51 {offsets = [0, 24], sizes = [8, 8], strides = [1, 1]} : vector<8x32xbf16> to vector<8x8xbf16>
    %cst_60 = arith.constant dense<0.000000e+00> : vector<12x8xf32>
    %148 = tpu.matmul %146, %147, %cst_60 {dimension_numbers = #tpu.dot_dimension_numbers<[1], [0], [0], [1], [0, 0, 1, 1], [], []>} : vector<12x8xbf16>, vector<8x8xbf16>, vector<12x8xf32> -> vector<12x8xf32>
    %149 = vector.broadcast %145 : vector<12x1xf32> to vector<12x8xf32>
    %150 = arith.mulf %148, %149 : vector<12x8xf32>
    %151 = tpu.concatenate %84, %106, %128, %150 in 1 : vector<12x8xf32>, vector<12x8xf32>, vector<12x8xf32>, vector<12x8xf32> -> vector<12x32xf32>
    %cst_61 = arith.constant 0.000000e+00 : f32
    %152 = vector.broadcast %cst_61 : f32 to vector<12x32xf32>
    %153 = arith.maximumf %151, %152 : vector<12x32xf32>
    %154 = vector.broadcast %12 : vector<12x1xf32> to vector<12x32xf32>
    %155 = arith.mulf %153, %154 : vector<12x32xf32>
    %156 = vector.extract_strided_slice %57 {offsets = [0, 32], sizes = [12, 4], strides = [1, 1]} : vector<12x48xf32> to vector<12x4xf32>
    %157 = tpu.transpose %156, [1, 0] : vector<12x4xf32> -> vector<4x12xf32>
    %158 = vector.extract_strided_slice %49 {offsets = [0, 36], sizes = [8, 4], strides = [1, 1]} : vector<8x40xf32> to vector<8x4xf32>
    %159 = vector.extract_strided_slice %158 {offsets = [0, 0], sizes = [8, 1], strides = [1, 1]} : vector<8x4xf32> to vector<8x1xf32>
    %160 = vector.extract_strided_slice %157 {offsets = [0, 0], sizes = [1, 12], strides = [1, 1]} : vector<4x12xf32> to vector<1x12xf32>
    %161 = vector.broadcast %159 : vector<8x1xf32> to vector<8x12xf32>
    %162 = vector.broadcast %160 : vector<1x12xf32> to vector<8x12xf32>
    %163 = arith.addf %161, %162 : vector<8x12xf32>
    %cst_62 = arith.constant 2.000000e-01 : f32
    %164 = vector.broadcast %cst_62 : f32 to vector<8x12xf32>
    %165 = arith.mulf %164, %163 : vector<8x12xf32>
    %166 = arith.maximumf %163, %165 : vector<8x12xf32>
    %167 = arith.addf %166, %18 : vector<8x12xf32>
    %cst_63 = arith.constant dense<0xFF800000> : vector<8xf32>
    %168 = vector.multi_reduction <maximumf>, %167, %cst_63 [1] : vector<8x12xf32> to vector<8xf32>
    %169 = vector.shape_cast %168 : vector<8xf32> to vector<8x1xf32>
    %170 = vector.broadcast %169 : vector<8x1xf32> to vector<8x12xf32>
    %171 = arith.subf %167, %170 : vector<8x12xf32>
    %172 = math.exp %171 : vector<8x12xf32>
    %cst_64 = arith.constant dense<0.000000e+00> : vector<8xf32>
    %173 = vector.multi_reduction <add>, %172, %cst_64 [1] : vector<8x12xf32> to vector<8xf32>
    %174 = vector.shape_cast %173 : vector<8xf32> to vector<8x1xf32>
    %175 = tpu.reciprocal %174 {approx = true} : vector<8x1xf32> -> vector<8x1xf32>
    %176 = arith.truncf %172 : vector<8x12xf32> to vector<8x12xbf16>
    %177 = vector.extract_strided_slice %59 {offsets = [0, 0], sizes = [12, 8], strides = [1, 1]} : vector<12x32xbf16> to vector<12x8xbf16>
    %cst_65 = arith.constant dense<0.000000e+00> : vector<8x8xf32>
    %178 = tpu.matmul %176, %177, %cst_65 {dimension_numbers = #tpu.dot_dimension_numbers<[1], [0], [0], [1], [0, 0, 1, 1], [], []>} : vector<8x12xbf16>, vector<12x8xbf16>, vector<8x8xf32> -> vector<8x8xf32>
    %179 = vector.broadcast %175 : vector<8x1xf32> to vector<8x8xf32>
    %180 = arith.mulf %178, %179 : vector<8x8xf32>
    %181 = vector.extract_strided_slice %158 {offsets = [0, 1], sizes = [8, 1], strides = [1, 1]} : vector<8x4xf32> to vector<8x1xf32>
    %182 = vector.extract_strided_slice %157 {offsets = [1, 0], sizes = [1, 12], strides = [1, 1]} : vector<4x12xf32> to vector<1x12xf32>
    %183 = vector.broadcast %181 : vector<8x1xf32> to vector<8x12xf32>
    %184 = vector.broadcast %182 : vector<1x12xf32> to vector<8x12xf32>
    %185 = arith.addf %183, %184 : vector<8x12xf32>
    %cst_66 = arith.constant 2.000000e-01 : f32
    %186 = vector.broadcast %cst_66 : f32 to vector<8x12xf32>
    %187 = arith.mulf %186, %185 : vector<8x12xf32>
    %188 = arith.maximumf %185, %187 : vector<8x12xf32>
    %189 = arith.addf %188, %18 : vector<8x12xf32>
    %cst_67 = arith.constant dense<0xFF800000> : vector<8xf32>
    %190 = vector.multi_reduction <maximumf>, %189, %cst_67 [1] : vector<8x12xf32> to vector<8xf32>
    %191 = vector.shape_cast %190 : vector<8xf32> to vector<8x1xf32>
    %192 = vector.broadcast %191 : vector<8x1xf32> to vector<8x12xf32>
    %193 = arith.subf %189, %192 : vector<8x12xf32>
    %194 = math.exp %193 : vector<8x12xf32>
    %cst_68 = arith.constant dense<0.000000e+00> : vector<8xf32>
    %195 = vector.multi_reduction <add>, %194, %cst_68 [1] : vector<8x12xf32> to vector<8xf32>
    %196 = vector.shape_cast %195 : vector<8xf32> to vector<8x1xf32>
    %197 = tpu.reciprocal %196 {approx = true} : vector<8x1xf32> -> vector<8x1xf32>
    %198 = arith.truncf %194 : vector<8x12xf32> to vector<8x12xbf16>
    %199 = vector.extract_strided_slice %59 {offsets = [0, 8], sizes = [12, 8], strides = [1, 1]} : vector<12x32xbf16> to vector<12x8xbf16>
    %cst_69 = arith.constant dense<0.000000e+00> : vector<8x8xf32>
    %200 = tpu.matmul %198, %199, %cst_69 {dimension_numbers = #tpu.dot_dimension_numbers<[1], [0], [0], [1], [0, 0, 1, 1], [], []>} : vector<8x12xbf16>, vector<12x8xbf16>, vector<8x8xf32> -> vector<8x8xf32>
    %201 = vector.broadcast %197 : vector<8x1xf32> to vector<8x8xf32>
    %202 = arith.mulf %200, %201 : vector<8x8xf32>
    %203 = vector.extract_strided_slice %158 {offsets = [0, 2], sizes = [8, 1], strides = [1, 1]} : vector<8x4xf32> to vector<8x1xf32>
    %204 = vector.extract_strided_slice %157 {offsets = [2, 0], sizes = [1, 12], strides = [1, 1]} : vector<4x12xf32> to vector<1x12xf32>
    %205 = vector.broadcast %203 : vector<8x1xf32> to vector<8x12xf32>
    %206 = vector.broadcast %204 : vector<1x12xf32> to vector<8x12xf32>
    %207 = arith.addf %205, %206 : vector<8x12xf32>
    %cst_70 = arith.constant 2.000000e-01 : f32
    %208 = vector.broadcast %cst_70 : f32 to vector<8x12xf32>
    %209 = arith.mulf %208, %207 : vector<8x12xf32>
    %210 = arith.maximumf %207, %209 : vector<8x12xf32>
    %211 = arith.addf %210, %18 : vector<8x12xf32>
    %cst_71 = arith.constant dense<0xFF800000> : vector<8xf32>
    %212 = vector.multi_reduction <maximumf>, %211, %cst_71 [1] : vector<8x12xf32> to vector<8xf32>
    %213 = vector.shape_cast %212 : vector<8xf32> to vector<8x1xf32>
    %214 = vector.broadcast %213 : vector<8x1xf32> to vector<8x12xf32>
    %215 = arith.subf %211, %214 : vector<8x12xf32>
    %216 = math.exp %215 : vector<8x12xf32>
    %cst_72 = arith.constant dense<0.000000e+00> : vector<8xf32>
    %217 = vector.multi_reduction <add>, %216, %cst_72 [1] : vector<8x12xf32> to vector<8xf32>
    %218 = vector.shape_cast %217 : vector<8xf32> to vector<8x1xf32>
    %219 = tpu.reciprocal %218 {approx = true} : vector<8x1xf32> -> vector<8x1xf32>
    %220 = arith.truncf %216 : vector<8x12xf32> to vector<8x12xbf16>
    %221 = vector.extract_strided_slice %59 {offsets = [0, 16], sizes = [12, 8], strides = [1, 1]} : vector<12x32xbf16> to vector<12x8xbf16>
    %cst_73 = arith.constant dense<0.000000e+00> : vector<8x8xf32>
    %222 = tpu.matmul %220, %221, %cst_73 {dimension_numbers = #tpu.dot_dimension_numbers<[1], [0], [0], [1], [0, 0, 1, 1], [], []>} : vector<8x12xbf16>, vector<12x8xbf16>, vector<8x8xf32> -> vector<8x8xf32>
    %223 = vector.broadcast %219 : vector<8x1xf32> to vector<8x8xf32>
    %224 = arith.mulf %222, %223 : vector<8x8xf32>
    %225 = vector.extract_strided_slice %158 {offsets = [0, 3], sizes = [8, 1], strides = [1, 1]} : vector<8x4xf32> to vector<8x1xf32>
    %226 = vector.extract_strided_slice %157 {offsets = [3, 0], sizes = [1, 12], strides = [1, 1]} : vector<4x12xf32> to vector<1x12xf32>
    %227 = vector.broadcast %225 : vector<8x1xf32> to vector<8x12xf32>
    %228 = vector.broadcast %226 : vector<1x12xf32> to vector<8x12xf32>
    %229 = arith.addf %227, %228 : vector<8x12xf32>
    %cst_74 = arith.constant 2.000000e-01 : f32
    %230 = vector.broadcast %cst_74 : f32 to vector<8x12xf32>
    %231 = arith.mulf %230, %229 : vector<8x12xf32>
    %232 = arith.maximumf %229, %231 : vector<8x12xf32>
    %233 = arith.addf %232, %18 : vector<8x12xf32>
    %cst_75 = arith.constant dense<0xFF800000> : vector<8xf32>
    %234 = vector.multi_reduction <maximumf>, %233, %cst_75 [1] : vector<8x12xf32> to vector<8xf32>
    %235 = vector.shape_cast %234 : vector<8xf32> to vector<8x1xf32>
    %236 = vector.broadcast %235 : vector<8x1xf32> to vector<8x12xf32>
    %237 = arith.subf %233, %236 : vector<8x12xf32>
    %238 = math.exp %237 : vector<8x12xf32>
    %cst_76 = arith.constant dense<0.000000e+00> : vector<8xf32>
    %239 = vector.multi_reduction <add>, %238, %cst_76 [1] : vector<8x12xf32> to vector<8xf32>
    %240 = vector.shape_cast %239 : vector<8xf32> to vector<8x1xf32>
    %241 = tpu.reciprocal %240 {approx = true} : vector<8x1xf32> -> vector<8x1xf32>
    %242 = arith.truncf %238 : vector<8x12xf32> to vector<8x12xbf16>
    %243 = vector.extract_strided_slice %59 {offsets = [0, 24], sizes = [12, 8], strides = [1, 1]} : vector<12x32xbf16> to vector<12x8xbf16>
    %cst_77 = arith.constant dense<0.000000e+00> : vector<8x8xf32>
    %244 = tpu.matmul %242, %243, %cst_77 {dimension_numbers = #tpu.dot_dimension_numbers<[1], [0], [0], [1], [0, 0, 1, 1], [], []>} : vector<8x12xbf16>, vector<12x8xbf16>, vector<8x8xf32> -> vector<8x8xf32>
    %245 = vector.broadcast %241 : vector<8x1xf32> to vector<8x8xf32>
    %246 = arith.mulf %244, %245 : vector<8x8xf32>
    %247 = tpu.concatenate %180, %202, %224, %246 in 1 : vector<8x8xf32>, vector<8x8xf32>, vector<8x8xf32>, vector<8x8xf32> -> vector<8x32xf32>
    %cst_78 = arith.constant 0.000000e+00 : f32
    %248 = vector.broadcast %cst_78 : f32 to vector<8x32xf32>
    %249 = arith.maximumf %247, %248 : vector<8x32xf32>
    %250 = vector.broadcast %25 : vector<8x1xf32> to vector<8x32xf32>
    %251 = arith.mulf %249, %250 : vector<8x32xf32>
    %252 = vector.extract_strided_slice %57 {offsets = [0, 36], sizes = [12, 4], strides = [1, 1]} : vector<12x48xf32> to vector<12x4xf32>
    %253 = tpu.transpose %252, [1, 0] : vector<12x4xf32> -> vector<4x12xf32>
    %254 = vector.extract_strided_slice %57 {offsets = [0, 44], sizes = [12, 4], strides = [1, 1]} : vector<12x48xf32> to vector<12x4xf32>
    %255 = vector.extract_strided_slice %254 {offsets = [0, 0], sizes = [12, 1], strides = [1, 1]} : vector<12x4xf32> to vector<12x1xf32>
    %256 = vector.extract_strided_slice %253 {offsets = [0, 0], sizes = [1, 12], strides = [1, 1]} : vector<4x12xf32> to vector<1x12xf32>
    %257 = vector.broadcast %255 : vector<12x1xf32> to vector<12x12xf32>
    %258 = vector.broadcast %256 : vector<1x12xf32> to vector<12x12xf32>
    %259 = arith.addf %257, %258 : vector<12x12xf32>
    %cst_79 = arith.constant 2.000000e-01 : f32
    %260 = vector.broadcast %cst_79 : f32 to vector<12x12xf32>
    %261 = arith.mulf %260, %259 : vector<12x12xf32>
    %262 = arith.maximumf %259, %261 : vector<12x12xf32>
    %263 = arith.addf %262, %31 : vector<12x12xf32>
    %cst_80 = arith.constant dense<0xFF800000> : vector<12xf32>
    %264 = vector.multi_reduction <maximumf>, %263, %cst_80 [1] : vector<12x12xf32> to vector<12xf32>
    %265 = vector.shape_cast %264 : vector<12xf32> to vector<12x1xf32>
    %266 = vector.broadcast %265 : vector<12x1xf32> to vector<12x12xf32>
    %267 = arith.subf %263, %266 : vector<12x12xf32>
    %268 = math.exp %267 : vector<12x12xf32>
    %cst_81 = arith.constant dense<0.000000e+00> : vector<12xf32>
    %269 = vector.multi_reduction <add>, %268, %cst_81 [1] : vector<12x12xf32> to vector<12xf32>
    %270 = vector.shape_cast %269 : vector<12xf32> to vector<12x1xf32>
    %271 = tpu.reciprocal %270 {approx = true} : vector<12x1xf32> -> vector<12x1xf32>
    %272 = arith.truncf %268 : vector<12x12xf32> to vector<12x12xbf16>
    %273 = vector.extract_strided_slice %59 {offsets = [0, 0], sizes = [12, 8], strides = [1, 1]} : vector<12x32xbf16> to vector<12x8xbf16>
    %cst_82 = arith.constant dense<0.000000e+00> : vector<12x8xf32>
    %274 = tpu.matmul %272, %273, %cst_82 {dimension_numbers = #tpu.dot_dimension_numbers<[1], [0], [0], [1], [0, 0, 1, 1], [], []>} : vector<12x12xbf16>, vector<12x8xbf16>, vector<12x8xf32> -> vector<12x8xf32>
    %275 = vector.broadcast %271 : vector<12x1xf32> to vector<12x8xf32>
    %276 = arith.mulf %274, %275 : vector<12x8xf32>
    %277 = vector.extract_strided_slice %254 {offsets = [0, 1], sizes = [12, 1], strides = [1, 1]} : vector<12x4xf32> to vector<12x1xf32>
    %278 = vector.extract_strided_slice %253 {offsets = [1, 0], sizes = [1, 12], strides = [1, 1]} : vector<4x12xf32> to vector<1x12xf32>
    %279 = vector.broadcast %277 : vector<12x1xf32> to vector<12x12xf32>
    %280 = vector.broadcast %278 : vector<1x12xf32> to vector<12x12xf32>
    %281 = arith.addf %279, %280 : vector<12x12xf32>
    %cst_83 = arith.constant 2.000000e-01 : f32
    %282 = vector.broadcast %cst_83 : f32 to vector<12x12xf32>
    %283 = arith.mulf %282, %281 : vector<12x12xf32>
    %284 = arith.maximumf %281, %283 : vector<12x12xf32>
    %285 = arith.addf %284, %31 : vector<12x12xf32>
    %cst_84 = arith.constant dense<0xFF800000> : vector<12xf32>
    %286 = vector.multi_reduction <maximumf>, %285, %cst_84 [1] : vector<12x12xf32> to vector<12xf32>
    %287 = vector.shape_cast %286 : vector<12xf32> to vector<12x1xf32>
    %288 = vector.broadcast %287 : vector<12x1xf32> to vector<12x12xf32>
    %289 = arith.subf %285, %288 : vector<12x12xf32>
    %290 = math.exp %289 : vector<12x12xf32>
    %cst_85 = arith.constant dense<0.000000e+00> : vector<12xf32>
    %291 = vector.multi_reduction <add>, %290, %cst_85 [1] : vector<12x12xf32> to vector<12xf32>
    %292 = vector.shape_cast %291 : vector<12xf32> to vector<12x1xf32>
    %293 = tpu.reciprocal %292 {approx = true} : vector<12x1xf32> -> vector<12x1xf32>
    %294 = arith.truncf %290 : vector<12x12xf32> to vector<12x12xbf16>
    %295 = vector.extract_strided_slice %59 {offsets = [0, 8], sizes = [12, 8], strides = [1, 1]} : vector<12x32xbf16> to vector<12x8xbf16>
    %cst_86 = arith.constant dense<0.000000e+00> : vector<12x8xf32>
    %296 = tpu.matmul %294, %295, %cst_86 {dimension_numbers = #tpu.dot_dimension_numbers<[1], [0], [0], [1], [0, 0, 1, 1], [], []>} : vector<12x12xbf16>, vector<12x8xbf16>, vector<12x8xf32> -> vector<12x8xf32>
    %297 = vector.broadcast %293 : vector<12x1xf32> to vector<12x8xf32>
    %298 = arith.mulf %296, %297 : vector<12x8xf32>
    %299 = vector.extract_strided_slice %254 {offsets = [0, 2], sizes = [12, 1], strides = [1, 1]} : vector<12x4xf32> to vector<12x1xf32>
    %300 = vector.extract_strided_slice %253 {offsets = [2, 0], sizes = [1, 12], strides = [1, 1]} : vector<4x12xf32> to vector<1x12xf32>
    %301 = vector.broadcast %299 : vector<12x1xf32> to vector<12x12xf32>
    %302 = vector.broadcast %300 : vector<1x12xf32> to vector<12x12xf32>
    %303 = arith.addf %301, %302 : vector<12x12xf32>
    %cst_87 = arith.constant 2.000000e-01 : f32
    %304 = vector.broadcast %cst_87 : f32 to vector<12x12xf32>
    %305 = arith.mulf %304, %303 : vector<12x12xf32>
    %306 = arith.maximumf %303, %305 : vector<12x12xf32>
    %307 = arith.addf %306, %31 : vector<12x12xf32>
    %cst_88 = arith.constant dense<0xFF800000> : vector<12xf32>
    %308 = vector.multi_reduction <maximumf>, %307, %cst_88 [1] : vector<12x12xf32> to vector<12xf32>
    %309 = vector.shape_cast %308 : vector<12xf32> to vector<12x1xf32>
    %310 = vector.broadcast %309 : vector<12x1xf32> to vector<12x12xf32>
    %311 = arith.subf %307, %310 : vector<12x12xf32>
    %312 = math.exp %311 : vector<12x12xf32>
    %cst_89 = arith.constant dense<0.000000e+00> : vector<12xf32>
    %313 = vector.multi_reduction <add>, %312, %cst_89 [1] : vector<12x12xf32> to vector<12xf32>
    %314 = vector.shape_cast %313 : vector<12xf32> to vector<12x1xf32>
    %315 = tpu.reciprocal %314 {approx = true} : vector<12x1xf32> -> vector<12x1xf32>
    %316 = arith.truncf %312 : vector<12x12xf32> to vector<12x12xbf16>
    %317 = vector.extract_strided_slice %59 {offsets = [0, 16], sizes = [12, 8], strides = [1, 1]} : vector<12x32xbf16> to vector<12x8xbf16>
    %cst_90 = arith.constant dense<0.000000e+00> : vector<12x8xf32>
    %318 = tpu.matmul %316, %317, %cst_90 {dimension_numbers = #tpu.dot_dimension_numbers<[1], [0], [0], [1], [0, 0, 1, 1], [], []>} : vector<12x12xbf16>, vector<12x8xbf16>, vector<12x8xf32> -> vector<12x8xf32>
    %319 = vector.broadcast %315 : vector<12x1xf32> to vector<12x8xf32>
    %320 = arith.mulf %318, %319 : vector<12x8xf32>
    %321 = vector.extract_strided_slice %254 {offsets = [0, 3], sizes = [12, 1], strides = [1, 1]} : vector<12x4xf32> to vector<12x1xf32>
    %322 = vector.extract_strided_slice %253 {offsets = [3, 0], sizes = [1, 12], strides = [1, 1]} : vector<4x12xf32> to vector<1x12xf32>
    %323 = vector.broadcast %321 : vector<12x1xf32> to vector<12x12xf32>
    %324 = vector.broadcast %322 : vector<1x12xf32> to vector<12x12xf32>
    %325 = arith.addf %323, %324 : vector<12x12xf32>
    %cst_91 = arith.constant 2.000000e-01 : f32
    %326 = vector.broadcast %cst_91 : f32 to vector<12x12xf32>
    %327 = arith.mulf %326, %325 : vector<12x12xf32>
    %328 = arith.maximumf %325, %327 : vector<12x12xf32>
    %329 = arith.addf %328, %31 : vector<12x12xf32>
    %cst_92 = arith.constant dense<0xFF800000> : vector<12xf32>
    %330 = vector.multi_reduction <maximumf>, %329, %cst_92 [1] : vector<12x12xf32> to vector<12xf32>
    %331 = vector.shape_cast %330 : vector<12xf32> to vector<12x1xf32>
    %332 = vector.broadcast %331 : vector<12x1xf32> to vector<12x12xf32>
    %333 = arith.subf %329, %332 : vector<12x12xf32>
    %334 = math.exp %333 : vector<12x12xf32>
    %cst_93 = arith.constant dense<0.000000e+00> : vector<12xf32>
    %335 = vector.multi_reduction <add>, %334, %cst_93 [1] : vector<12x12xf32> to vector<12xf32>
    %336 = vector.shape_cast %335 : vector<12xf32> to vector<12x1xf32>
    %337 = tpu.reciprocal %336 {approx = true} : vector<12x1xf32> -> vector<12x1xf32>
    %338 = arith.truncf %334 : vector<12x12xf32> to vector<12x12xbf16>
    %339 = vector.extract_strided_slice %59 {offsets = [0, 24], sizes = [12, 8], strides = [1, 1]} : vector<12x32xbf16> to vector<12x8xbf16>
    %cst_94 = arith.constant dense<0.000000e+00> : vector<12x8xf32>
    %340 = tpu.matmul %338, %339, %cst_94 {dimension_numbers = #tpu.dot_dimension_numbers<[1], [0], [0], [1], [0, 0, 1, 1], [], []>} : vector<12x12xbf16>, vector<12x8xbf16>, vector<12x8xf32> -> vector<12x8xf32>
    %341 = vector.broadcast %337 : vector<12x1xf32> to vector<12x8xf32>
    %342 = arith.mulf %340, %341 : vector<12x8xf32>
    %343 = tpu.concatenate %276, %298, %320, %342 in 1 : vector<12x8xf32>, vector<12x8xf32>, vector<12x8xf32>, vector<12x8xf32> -> vector<12x32xf32>
    %cst_95 = arith.constant 0.000000e+00 : f32
    %344 = vector.broadcast %cst_95 : f32 to vector<12x32xf32>
    %345 = arith.maximumf %343, %344 : vector<12x32xf32>
    %346 = vector.broadcast %38 : vector<12x1xf32> to vector<12x32xf32>
    %347 = arith.mulf %345, %346 : vector<12x32xf32>
    %cst_96 = arith.constant dense<0.000000e+00> : vector<8x32xf32>
    %348 = tpu.matmul %251, %41, %cst_96 {dimension_numbers = #tpu.dot_dimension_numbers<[1], [0], [0], [1], [0, 0, 1, 1], [], []>} : vector<8x32xf32>, vector<32x32xf32>, vector<8x32xf32> -> vector<8x32xf32>
    %349 = vector.broadcast %42 : vector<1x32xf32> to vector<8x32xf32>
    %350 = arith.addf %348, %349 : vector<8x32xf32>
    %351 = math.tanh %350 : vector<8x32xf32>
    %cst_97 = arith.constant dense<0.000000e+00> : vector<32xf32>
    %352 = vector.multi_reduction <add>, %351, %cst_97 [0] : vector<8x32xf32> to vector<32xf32>
    %353 = vector.shape_cast %352 : vector<32xf32> to vector<1x32xf32>
    %cst_98 = arith.constant 8.000000e+00 : f32
    %354 = vector.broadcast %cst_98 : f32 to vector<1x32xf32>
    %355 = arith.divf %353, %354 : vector<1x32xf32>
    %cst_99 = arith.constant dense<0.000000e+00> : vector<1x1xf32>
    %356 = tpu.matmul %355, %43, %cst_99 {dimension_numbers = #tpu.dot_dimension_numbers<[1], [0], [0], [1], [0, 0, 1, 1], [], []>} : vector<1x32xf32>, vector<32x1xf32>, vector<1x1xf32> -> vector<1x1xf32>
    %357 = arith.subf %356, %356 : vector<1x1xf32>
    %358 = math.exp %357 : vector<1x1xf32>
    %cst_100 = arith.constant 1.000000e+00 : f32
    %359 = vector.broadcast %cst_100 : f32 to vector<1x1xf32>
    %360 = arith.divf %359, %358 : vector<1x1xf32>
    %361 = arith.mulf %358, %360 : vector<1x1xf32>
    %362 = vector.broadcast %361 : vector<1x1xf32> to vector<8x32xf32>
    %363 = arith.mulf %362, %251 : vector<8x32xf32>
    %cst_101 = arith.constant dense<0.000000e+00> : vector<12x32xf32>
    %364 = tpu.matmul %155, %41, %cst_101 {dimension_numbers = #tpu.dot_dimension_numbers<[1], [0], [0], [1], [0, 0, 1, 1], [], []>} : vector<12x32xf32>, vector<32x32xf32>, vector<12x32xf32> -> vector<12x32xf32>
    %365 = vector.broadcast %42 : vector<1x32xf32> to vector<12x32xf32>
    %366 = arith.addf %364, %365 : vector<12x32xf32>
    %367 = math.tanh %366 : vector<12x32xf32>
    %cst_102 = arith.constant dense<0.000000e+00> : vector<32xf32>
    %368 = vector.multi_reduction <add>, %367, %cst_102 [0] : vector<12x32xf32> to vector<32xf32>
    %369 = vector.shape_cast %368 : vector<32xf32> to vector<1x32xf32>
    %cst_103 = arith.constant 1.200000e+01 : f32
    %370 = vector.broadcast %cst_103 : f32 to vector<1x32xf32>
    %371 = arith.divf %369, %370 : vector<1x32xf32>
    %cst_104 = arith.constant dense<0.000000e+00> : vector<1x1xf32>
    %372 = tpu.matmul %371, %43, %cst_104 {dimension_numbers = #tpu.dot_dimension_numbers<[1], [0], [0], [1], [0, 0, 1, 1], [], []>} : vector<1x32xf32>, vector<32x1xf32>, vector<1x1xf32> -> vector<1x1xf32>
    %cst_105 = arith.constant dense<0.000000e+00> : vector<12x32xf32>
    %373 = tpu.matmul %347, %41, %cst_105 {dimension_numbers = #tpu.dot_dimension_numbers<[1], [0], [0], [1], [0, 0, 1, 1], [], []>} : vector<12x32xf32>, vector<32x32xf32>, vector<12x32xf32> -> vector<12x32xf32>
    %374 = vector.broadcast %42 : vector<1x32xf32> to vector<12x32xf32>
    %375 = arith.addf %373, %374 : vector<12x32xf32>
    %376 = math.tanh %375 : vector<12x32xf32>
    %cst_106 = arith.constant dense<0.000000e+00> : vector<32xf32>
    %377 = vector.multi_reduction <add>, %376, %cst_106 [0] : vector<12x32xf32> to vector<32xf32>
    %378 = vector.shape_cast %377 : vector<32xf32> to vector<1x32xf32>
    %cst_107 = arith.constant 1.200000e+01 : f32
    %379 = vector.broadcast %cst_107 : f32 to vector<1x32xf32>
    %380 = arith.divf %378, %379 : vector<1x32xf32>
    %cst_108 = arith.constant dense<0.000000e+00> : vector<1x1xf32>
    %381 = tpu.matmul %380, %43, %cst_108 {dimension_numbers = #tpu.dot_dimension_numbers<[1], [0], [0], [1], [0, 0, 1, 1], [], []>} : vector<1x32xf32>, vector<32x1xf32>, vector<1x1xf32> -> vector<1x1xf32>
    %382 = arith.maximumf %372, %381 : vector<1x1xf32>
    %383 = arith.subf %372, %382 : vector<1x1xf32>
    %384 = math.exp %383 : vector<1x1xf32>
    %385 = arith.subf %381, %382 : vector<1x1xf32>
    %386 = math.exp %385 : vector<1x1xf32>
    %387 = arith.addf %384, %386 : vector<1x1xf32>
    %cst_109 = arith.constant 1.000000e+00 : f32
    %388 = vector.broadcast %cst_109 : f32 to vector<1x1xf32>
    %389 = arith.divf %388, %387 : vector<1x1xf32>
    %390 = arith.mulf %384, %389 : vector<1x1xf32>
    %391 = vector.broadcast %390 : vector<1x1xf32> to vector<12x32xf32>
    %392 = arith.mulf %391, %155 : vector<12x32xf32>
    %393 = arith.mulf %386, %389 : vector<1x1xf32>
    %394 = vector.broadcast %393 : vector<1x1xf32> to vector<12x32xf32>
    %395 = arith.mulf %394, %347 : vector<12x32xf32>
    %396 = arith.addf %392, %395 : vector<12x32xf32>
    %c0_110 = arith.constant 0 : index
    %c0_111 = arith.constant 0 : index
    %397 = vector.load %arg16[%c0_110, %c0_111] : memref<8x8xf32, #tpu.memory_space<vmem>>, vector<8x8xf32>
    %c0_112 = arith.constant 0 : index
    %c0_113 = arith.constant 0 : index
    %398 = vector.load %arg17[%c0_112, %c0_113] : memref<1x8xf32, #tpu.memory_space<vmem>>, vector<1x8xf32>
    %c0_114 = arith.constant 0 : index
    %c0_115 = arith.constant 0 : index
    %399 = vector.load %arg18[%c0_114, %c0_115] : memref<8x1xf32, #tpu.memory_space<vmem>>, vector<8x1xf32>
    %400 = arith.truncf %363 : vector<8x32xf32> to vector<8x32xbf16>
    %c0_116 = arith.constant 0 : index
    %c0_117 = arith.constant 0 : index
    %401 = vector.load %arg12[%c0_116, %c0_117] : memref<32x16xbf16, #tpu.memory_space<vmem>>, vector<32x16xbf16>
    %cst_118 = arith.constant dense<0.000000e+00> : vector<8x16xf32>
    %402 = tpu.matmul %400, %401, %cst_118 {dimension_numbers = #tpu.dot_dimension_numbers<[1], [0], [0], [1], [0, 0, 1, 1], [], []>} : vector<8x32xbf16>, vector<32x16xbf16>, vector<8x16xf32> -> vector<8x16xf32>
    %c0_119 = arith.constant 0 : index
    %c0_120 = arith.constant 0 : index
    %403 = vector.load %arg13[%c0_119, %c0_120] : memref<1x16xf32, #tpu.memory_space<vmem>>, vector<1x16xf32>
    %404 = vector.broadcast %403 : vector<1x16xf32> to vector<8x16xf32>
    %405 = arith.addf %402, %404 : vector<8x16xf32>
    %406 = arith.truncf %396 : vector<12x32xf32> to vector<12x32xbf16>
    %c0_121 = arith.constant 0 : index
    %c0_122 = arith.constant 0 : index
    %407 = vector.load %arg14[%c0_121, %c0_122] : memref<32x24xbf16, #tpu.memory_space<vmem>>, vector<32x24xbf16>
    %cst_123 = arith.constant dense<0.000000e+00> : vector<12x24xf32>
    %408 = tpu.matmul %406, %407, %cst_123 {dimension_numbers = #tpu.dot_dimension_numbers<[1], [0], [0], [1], [0, 0, 1, 1], [], []>} : vector<12x32xbf16>, vector<32x24xbf16>, vector<12x24xf32> -> vector<12x24xf32>
    %c0_124 = arith.constant 0 : index
    %c0_125 = arith.constant 0 : index
    %409 = vector.load %arg15[%c0_124, %c0_125] : memref<1x24xf32, #tpu.memory_space<vmem>>, vector<1x24xf32>
    %410 = vector.broadcast %409 : vector<1x24xf32> to vector<12x24xf32>
    %411 = arith.addf %408, %410 : vector<12x24xf32>
    %412 = vector.extract_strided_slice %411 {offsets = [0, 0], sizes = [12, 8], strides = [1, 1]} : vector<12x24xf32> to vector<12x8xf32>
    %413 = arith.truncf %412 : vector<12x8xf32> to vector<12x8xbf16>
    %414 = vector.extract_strided_slice %411 {offsets = [0, 8], sizes = [12, 4], strides = [1, 1]} : vector<12x24xf32> to vector<12x4xf32>
    %415 = tpu.transpose %414, [1, 0] : vector<12x4xf32> -> vector<4x12xf32>
    %416 = vector.extract_strided_slice %405 {offsets = [0, 12], sizes = [8, 4], strides = [1, 1]} : vector<8x16xf32> to vector<8x4xf32>
    %417 = vector.extract_strided_slice %416 {offsets = [0, 0], sizes = [8, 1], strides = [1, 1]} : vector<8x4xf32> to vector<8x1xf32>
    %418 = vector.extract_strided_slice %415 {offsets = [0, 0], sizes = [1, 12], strides = [1, 1]} : vector<4x12xf32> to vector<1x12xf32>
    %419 = vector.broadcast %417 : vector<8x1xf32> to vector<8x12xf32>
    %420 = vector.broadcast %418 : vector<1x12xf32> to vector<8x12xf32>
    %421 = arith.addf %419, %420 : vector<8x12xf32>
    %cst_126 = arith.constant 2.000000e-01 : f32
    %422 = vector.broadcast %cst_126 : f32 to vector<8x12xf32>
    %423 = arith.mulf %422, %421 : vector<8x12xf32>
    %424 = arith.maximumf %421, %423 : vector<8x12xf32>
    %425 = arith.addf %424, %18 : vector<8x12xf32>
    %cst_127 = arith.constant dense<0xFF800000> : vector<8xf32>
    %426 = vector.multi_reduction <maximumf>, %425, %cst_127 [1] : vector<8x12xf32> to vector<8xf32>
    %427 = vector.shape_cast %426 : vector<8xf32> to vector<8x1xf32>
    %428 = vector.broadcast %427 : vector<8x1xf32> to vector<8x12xf32>
    %429 = arith.subf %425, %428 : vector<8x12xf32>
    %430 = math.exp %429 : vector<8x12xf32>
    %cst_128 = arith.constant dense<0.000000e+00> : vector<8xf32>
    %431 = vector.multi_reduction <add>, %430, %cst_128 [1] : vector<8x12xf32> to vector<8xf32>
    %432 = vector.shape_cast %431 : vector<8xf32> to vector<8x1xf32>
    %433 = tpu.reciprocal %432 {approx = true} : vector<8x1xf32> -> vector<8x1xf32>
    %434 = arith.truncf %430 : vector<8x12xf32> to vector<8x12xbf16>
    %435 = vector.extract_strided_slice %413 {offsets = [0, 0], sizes = [12, 2], strides = [1, 1]} : vector<12x8xbf16> to vector<12x2xbf16>
    %cst_129 = arith.constant dense<0.000000e+00> : vector<8x2xf32>
    %436 = tpu.matmul %434, %435, %cst_129 {dimension_numbers = #tpu.dot_dimension_numbers<[1], [0], [0], [1], [0, 0, 1, 1], [], []>} : vector<8x12xbf16>, vector<12x2xbf16>, vector<8x2xf32> -> vector<8x2xf32>
    %437 = vector.broadcast %433 : vector<8x1xf32> to vector<8x2xf32>
    %438 = arith.mulf %436, %437 : vector<8x2xf32>
    %439 = vector.extract_strided_slice %416 {offsets = [0, 1], sizes = [8, 1], strides = [1, 1]} : vector<8x4xf32> to vector<8x1xf32>
    %440 = vector.extract_strided_slice %415 {offsets = [1, 0], sizes = [1, 12], strides = [1, 1]} : vector<4x12xf32> to vector<1x12xf32>
    %441 = vector.broadcast %439 : vector<8x1xf32> to vector<8x12xf32>
    %442 = vector.broadcast %440 : vector<1x12xf32> to vector<8x12xf32>
    %443 = arith.addf %441, %442 : vector<8x12xf32>
    %cst_130 = arith.constant 2.000000e-01 : f32
    %444 = vector.broadcast %cst_130 : f32 to vector<8x12xf32>
    %445 = arith.mulf %444, %443 : vector<8x12xf32>
    %446 = arith.maximumf %443, %445 : vector<8x12xf32>
    %447 = arith.addf %446, %18 : vector<8x12xf32>
    %cst_131 = arith.constant dense<0xFF800000> : vector<8xf32>
    %448 = vector.multi_reduction <maximumf>, %447, %cst_131 [1] : vector<8x12xf32> to vector<8xf32>
    %449 = vector.shape_cast %448 : vector<8xf32> to vector<8x1xf32>
    %450 = vector.broadcast %449 : vector<8x1xf32> to vector<8x12xf32>
    %451 = arith.subf %447, %450 : vector<8x12xf32>
    %452 = math.exp %451 : vector<8x12xf32>
    %cst_132 = arith.constant dense<0.000000e+00> : vector<8xf32>
    %453 = vector.multi_reduction <add>, %452, %cst_132 [1] : vector<8x12xf32> to vector<8xf32>
    %454 = vector.shape_cast %453 : vector<8xf32> to vector<8x1xf32>
    %455 = tpu.reciprocal %454 {approx = true} : vector<8x1xf32> -> vector<8x1xf32>
    %456 = arith.truncf %452 : vector<8x12xf32> to vector<8x12xbf16>
    %457 = vector.extract_strided_slice %413 {offsets = [0, 2], sizes = [12, 2], strides = [1, 1]} : vector<12x8xbf16> to vector<12x2xbf16>
    %cst_133 = arith.constant dense<0.000000e+00> : vector<8x2xf32>
    %458 = tpu.matmul %456, %457, %cst_133 {dimension_numbers = #tpu.dot_dimension_numbers<[1], [0], [0], [1], [0, 0, 1, 1], [], []>} : vector<8x12xbf16>, vector<12x2xbf16>, vector<8x2xf32> -> vector<8x2xf32>
    %459 = vector.broadcast %455 : vector<8x1xf32> to vector<8x2xf32>
    %460 = arith.mulf %458, %459 : vector<8x2xf32>
    %461 = vector.extract_strided_slice %416 {offsets = [0, 2], sizes = [8, 1], strides = [1, 1]} : vector<8x4xf32> to vector<8x1xf32>
    %462 = vector.extract_strided_slice %415 {offsets = [2, 0], sizes = [1, 12], strides = [1, 1]} : vector<4x12xf32> to vector<1x12xf32>
    %463 = vector.broadcast %461 : vector<8x1xf32> to vector<8x12xf32>
    %464 = vector.broadcast %462 : vector<1x12xf32> to vector<8x12xf32>
    %465 = arith.addf %463, %464 : vector<8x12xf32>
    %cst_134 = arith.constant 2.000000e-01 : f32
    %466 = vector.broadcast %cst_134 : f32 to vector<8x12xf32>
    %467 = arith.mulf %466, %465 : vector<8x12xf32>
    %468 = arith.maximumf %465, %467 : vector<8x12xf32>
    %469 = arith.addf %468, %18 : vector<8x12xf32>
    %cst_135 = arith.constant dense<0xFF800000> : vector<8xf32>
    %470 = vector.multi_reduction <maximumf>, %469, %cst_135 [1] : vector<8x12xf32> to vector<8xf32>
    %471 = vector.shape_cast %470 : vector<8xf32> to vector<8x1xf32>
    %472 = vector.broadcast %471 : vector<8x1xf32> to vector<8x12xf32>
    %473 = arith.subf %469, %472 : vector<8x12xf32>
    %474 = math.exp %473 : vector<8x12xf32>
    %cst_136 = arith.constant dense<0.000000e+00> : vector<8xf32>
    %475 = vector.multi_reduction <add>, %474, %cst_136 [1] : vector<8x12xf32> to vector<8xf32>
    %476 = vector.shape_cast %475 : vector<8xf32> to vector<8x1xf32>
    %477 = tpu.reciprocal %476 {approx = true} : vector<8x1xf32> -> vector<8x1xf32>
    %478 = arith.truncf %474 : vector<8x12xf32> to vector<8x12xbf16>
    %479 = vector.extract_strided_slice %413 {offsets = [0, 4], sizes = [12, 2], strides = [1, 1]} : vector<12x8xbf16> to vector<12x2xbf16>
    %cst_137 = arith.constant dense<0.000000e+00> : vector<8x2xf32>
    %480 = tpu.matmul %478, %479, %cst_137 {dimension_numbers = #tpu.dot_dimension_numbers<[1], [0], [0], [1], [0, 0, 1, 1], [], []>} : vector<8x12xbf16>, vector<12x2xbf16>, vector<8x2xf32> -> vector<8x2xf32>
    %481 = vector.broadcast %477 : vector<8x1xf32> to vector<8x2xf32>
    %482 = arith.mulf %480, %481 : vector<8x2xf32>
    %483 = vector.extract_strided_slice %416 {offsets = [0, 3], sizes = [8, 1], strides = [1, 1]} : vector<8x4xf32> to vector<8x1xf32>
    %484 = vector.extract_strided_slice %415 {offsets = [3, 0], sizes = [1, 12], strides = [1, 1]} : vector<4x12xf32> to vector<1x12xf32>
    %485 = vector.broadcast %483 : vector<8x1xf32> to vector<8x12xf32>
    %486 = vector.broadcast %484 : vector<1x12xf32> to vector<8x12xf32>
    %487 = arith.addf %485, %486 : vector<8x12xf32>
    %cst_138 = arith.constant 2.000000e-01 : f32
    %488 = vector.broadcast %cst_138 : f32 to vector<8x12xf32>
    %489 = arith.mulf %488, %487 : vector<8x12xf32>
    %490 = arith.maximumf %487, %489 : vector<8x12xf32>
    %491 = arith.addf %490, %18 : vector<8x12xf32>
    %cst_139 = arith.constant dense<0xFF800000> : vector<8xf32>
    %492 = vector.multi_reduction <maximumf>, %491, %cst_139 [1] : vector<8x12xf32> to vector<8xf32>
    %493 = vector.shape_cast %492 : vector<8xf32> to vector<8x1xf32>
    %494 = vector.broadcast %493 : vector<8x1xf32> to vector<8x12xf32>
    %495 = arith.subf %491, %494 : vector<8x12xf32>
    %496 = math.exp %495 : vector<8x12xf32>
    %cst_140 = arith.constant dense<0.000000e+00> : vector<8xf32>
    %497 = vector.multi_reduction <add>, %496, %cst_140 [1] : vector<8x12xf32> to vector<8xf32>
    %498 = vector.shape_cast %497 : vector<8xf32> to vector<8x1xf32>
    %499 = tpu.reciprocal %498 {approx = true} : vector<8x1xf32> -> vector<8x1xf32>
    %500 = arith.truncf %496 : vector<8x12xf32> to vector<8x12xbf16>
    %501 = vector.extract_strided_slice %413 {offsets = [0, 6], sizes = [12, 2], strides = [1, 1]} : vector<12x8xbf16> to vector<12x2xbf16>
    %cst_141 = arith.constant dense<0.000000e+00> : vector<8x2xf32>
    %502 = tpu.matmul %500, %501, %cst_141 {dimension_numbers = #tpu.dot_dimension_numbers<[1], [0], [0], [1], [0, 0, 1, 1], [], []>} : vector<8x12xbf16>, vector<12x2xbf16>, vector<8x2xf32> -> vector<8x2xf32>
    %503 = vector.broadcast %499 : vector<8x1xf32> to vector<8x2xf32>
    %504 = arith.mulf %502, %503 : vector<8x2xf32>
    %505 = tpu.concatenate %438, %460, %482, %504 in 1 : vector<8x2xf32>, vector<8x2xf32>, vector<8x2xf32>, vector<8x2xf32> -> vector<8x8xf32>
    %cst_142 = arith.constant 0.000000e+00 : f32
    %506 = vector.broadcast %cst_142 : f32 to vector<8x8xf32>
    %507 = arith.maximumf %505, %506 : vector<8x8xf32>
    %508 = vector.broadcast %25 : vector<8x1xf32> to vector<8x8xf32>
    %509 = arith.mulf %507, %508 : vector<8x8xf32>
    %cst_143 = arith.constant dense<0.000000e+00> : vector<8x8xf32>
    %510 = tpu.matmul %509, %397, %cst_143 {dimension_numbers = #tpu.dot_dimension_numbers<[1], [0], [0], [1], [0, 0, 1, 1], [], []>} : vector<8x8xf32>, vector<8x8xf32>, vector<8x8xf32> -> vector<8x8xf32>
    %511 = vector.broadcast %398 : vector<1x8xf32> to vector<8x8xf32>
    %512 = arith.addf %510, %511 : vector<8x8xf32>
    %513 = math.tanh %512 : vector<8x8xf32>
    %cst_144 = arith.constant dense<0.000000e+00> : vector<8xf32>
    %514 = vector.multi_reduction <add>, %513, %cst_144 [0] : vector<8x8xf32> to vector<8xf32>
    %515 = vector.shape_cast %514 : vector<8xf32> to vector<1x8xf32>
    %cst_145 = arith.constant 8.000000e+00 : f32
    %516 = vector.broadcast %cst_145 : f32 to vector<1x8xf32>
    %517 = arith.divf %515, %516 : vector<1x8xf32>
    %cst_146 = arith.constant dense<0.000000e+00> : vector<1x1xf32>
    %518 = tpu.matmul %517, %399, %cst_146 {dimension_numbers = #tpu.dot_dimension_numbers<[1], [0], [0], [1], [0, 0, 1, 1], [], []>} : vector<1x8xf32>, vector<8x1xf32>, vector<1x1xf32> -> vector<1x1xf32>
    %519 = arith.subf %518, %518 : vector<1x1xf32>
    %520 = math.exp %519 : vector<1x1xf32>
    %cst_147 = arith.constant 1.000000e+00 : f32
    %521 = vector.broadcast %cst_147 : f32 to vector<1x1xf32>
    %522 = arith.divf %521, %520 : vector<1x1xf32>
    %523 = arith.mulf %520, %522 : vector<1x1xf32>
    %524 = vector.broadcast %523 : vector<1x1xf32> to vector<8x8xf32>
    %525 = arith.mulf %524, %509 : vector<8x8xf32>
    %c0_148 = arith.constant 0 : index
    %c0_149 = arith.constant 0 : index
    %526 = vector.load %arg19[%c0_148, %c0_149] : memref<8x8xf32, #tpu.memory_space<vmem>>, vector<8x8xf32>
    tpu.vector_store %arg19[%c0_148, %c0_149], %525 {strides = array<i32>} : memref<8x8xf32, #tpu.memory_space<vmem>>, vector<8x8xf32>,
    return
  }
}

</mosaic_0001>

<llo_original>
// kernel: tpu_custom_call.1
$region0: #{tpu_custom_call.1}
  #allocation0 [shape = 'u32[]', space=smem, size = 0x4, offset = 0x4, fixed_abs, tag = 'smem constant byte address 0x4 - core index']
  #allocation1 [shape = 'u32[72,128]{1,0:T(1,128)}', space=vmem, size = 0x9000, scoped, tag = 'internal scratch']
  %s0 = inlined_call_operand.vmem [shape: f32[8,16], index: 0, kind: input, shape index: {}]
  %s1 = inlined_call_operand.vmem [shape: f32[12,16], index: 1, kind: input, shape index: {}]
  %s2 = inlined_call_operand.vmem [shape: f32[12,8], index: 2, kind: input, shape index: {}]
  %s3 = inlined_call_operand.vmem [shape: f32[8,12], index: 3, kind: input, shape index: {}]
  %s4 = inlined_call_operand.vmem [shape: f32[12,12], index: 4, kind: input, shape index: {}]
  %s5 = inlined_call_operand.vmem [shape: bf16[16,40], index: 5, kind: input, shape index: {}]
  %s6 = inlined_call_operand.vmem [shape: f32[1,40], index: 6, kind: input, shape index: {}]
  %s7 = inlined_call_operand.hbm [shape: bf16[16,48], index: 7, kind: input, shape index: {}]
  %s8 = inlined_call_operand.hbm [shape: f32[1,48], index: 8, kind: input, shape index: {}]
  %s9 = inlined_call_operand.vmem [shape: f32[32,32], index: 9, kind: input, shape index: {}]
  %s10 = inlined_call_operand.hbm [shape: f32[1,32], index: 10, kind: input, shape index: {}]
  %s11 = inlined_call_operand.vmem [shape: f32[32,1], index: 11, kind: input, shape index: {}]
  %s12 = inlined_call_operand.vmem [shape: bf16[32,16], index: 12, kind: input, shape index: {}]
  %s13 = inlined_call_operand.vmem [shape: f32[1,16], index: 13, kind: input, shape index: {}]
  %s14 = inlined_call_operand.vmem [shape: bf16[32,24], index: 14, kind: input, shape index: {}]
  %s15 = inlined_call_operand.vmem [shape: f32[1,24], index: 15, kind: input, shape index: {}]
  %s16 = inlined_call_operand.vmem [shape: f32[8,8], index: 16, kind: input, shape index: {}]
  %s17 = inlined_call_operand.vmem [shape: f32[1,8], index: 17, kind: input, shape index: {}]
  %s18 = inlined_call_operand.vmem [shape: f32[8,1], index: 18, kind: input, shape index: {}]
  %s19 = inlined_call_operand.hbm [shape: f32[8,8], index: 19, kind: output, shape index: {}]
  %s20 = sld [smem:[#allocation0]]
  $region98: #{tpu_custom_call.1} parent=0
    _
  %s22 = ssub.s32 1, %s20
  %s23 = scalar_select 0, %s22, %s20
  $region1: #{tpu_custom_call.1} parent=0
    #allocation2 [shape = 'u8[4096]{0}', space=vmem, size = 0x1000, scoped, tag = 'input window, operand 7, single buffered']
    #allocation3 [shape = 's32[1]{0}', space=sflag, size = 0x4, scoped, tag = 'scoped memory for tpu_custom_call.1']
    #allocation4 [shape = 's32[1]{0}', space=sflag, size = 0x4, scoped, tag = 'scoped memory for tpu_custom_call.1']
    #allocation5 [shape = 'u8[512]{0}', space=vmem, size = 0x400, scoped, tag = 'input window, operand 8, single buffered']
    #allocation6 [shape = 's32[1]{0}', space=sflag, size = 0x4, scoped, tag = 'scoped memory for tpu_custom_call.1']
    #allocation7 [shape = 'u8[512]{0}', space=vmem, size = 0x400, scoped, tag = 'input window, operand 10, single buffered']
    #allocation8 [shape = 'u8[4096]{0}', space=vmem, size = 0x1000, scoped, tag = 'output window, operand 0, single buffered']
    %24 = vsyncpa [#allocation3], 0
    %25 = vsyncpa [#allocation6], 0
    %26 = vsyncpa [#allocation4], 0
    // Predicated region
    $region2: #{tpu_custom_call.1} parent=1 // pred_check
      _
    $region3: #{tpu_custom_call.1} parent=1 // pred_check_branch
      %28 = sbr.rel (0) target = $region5
    $region4: #{tpu_custom_call.1} parent=1 // pred_region
      _
    $region5: #{tpu_custom_call.1} parent=1 // pred_fallthru
      _
    // Predicated region
    $region6: #{tpu_custom_call.1} parent=1 // pred_check
      _
    $region7: #{tpu_custom_call.1} parent=1 // pred_check_branch
      %30 = sbr.rel (0) target = $region9
    $region8: #{tpu_custom_call.1} parent=1 // pred_region
      _
    $region9: #{tpu_custom_call.1} parent=1 // pred_fallthru
      _
    // Predicated region
    $region10: #{tpu_custom_call.1} parent=1 // pred_check
      _
    $region11: #{tpu_custom_call.1} parent=1 // pred_check_branch
      %32 = sbr.rel (0) target = $region13
    $region12: #{tpu_custom_call.1} parent=1 // pred_region
      _
    $region13: #{tpu_custom_call.1} parent=1 // pred_fallthru
      _
    // Predicated region
    $region14: #{tpu_custom_call.1} parent=1 // pred_check
      _
    $region15: #{tpu_custom_call.1} parent=1 // pred_check_branch
      %34 = sbr.rel (0) target = $region17
    $region16: #{tpu_custom_call.1} parent=1 // pred_region
      _
    $region17: #{tpu_custom_call.1} parent=1 // pred_fallthru
      _
    // Predicated region
    $region18: #{tpu_custom_call.1} parent=1 // pred_check
      _
    $region19: #{tpu_custom_call.1} parent=1 // pred_check_branch
      %36 = sbr.rel (0) target = $region21
    $region20: #{tpu_custom_call.1} parent=1 // pred_region
      _
    $region21: #{tpu_custom_call.1} parent=1 // pred_fallthru
      _
    // Predicated region
    $region22: #{tpu_custom_call.1} parent=1 // pred_check
      _
    $region23: #{tpu_custom_call.1} parent=1 // pred_check_branch
      %38 = sbr.rel (0) target = $region25
    $region24: #{tpu_custom_call.1} parent=1 // pred_region
      _
    $region25: #{tpu_custom_call.1} parent=1 // pred_fallthru
      _
    // Predicated region
    $region26: #{tpu_custom_call.1} parent=1 // pred_check
      _
    $region27: #{tpu_custom_call.1} parent=1 // pred_check_branch
      %40 = sbr.rel (0) target = $region29
    $region28: #{tpu_custom_call.1} parent=1 // pred_region
      _
    $region29: #{tpu_custom_call.1} parent=1 // pred_fallthru
      _
    // Predicated region
    $region30: #{tpu_custom_call.1} parent=1 // pred_check
      _
    $region31: #{tpu_custom_call.1} parent=1 // pred_check_branch
      %42 = sbr.rel (0) target = $region33
    $region32: #{tpu_custom_call.1} parent=1 // pred_region
      %44 = vsyncadd [#allocation3], 0
      %s45 = sshll.u32 %s7, 4
      %s46 = int_to_ptr.hbm [resolvable:$true] %s45
      %s47 = sshll.u32 [#allocation2], 4
      %s48 = int_to_ptr.vmem [resolvable:$true] %s47
      %53 = dma.hbm_to_vmem [thread:$0]  %s46, 128, %s48, [#allocation3], 64, 64, 4
    $region33: #{tpu_custom_call.1} parent=1 // pred_fallthru
      _
    // Predicated region
    $region34: #{tpu_custom_call.1} parent=1 // pred_check
      _
    $region35: #{tpu_custom_call.1} parent=1 // pred_check_branch
      %55 = sbr.rel (0) target = $region37
    $region36: #{tpu_custom_call.1} parent=1 // pred_region
      %57 = vsyncadd [#allocation6], 0
      %s59 = sshll.u32 %s8, 4
      %s60 = int_to_ptr.hbm [resolvable:$true] %s59
      %s61 = sshll.u32 [#allocation5], 4
      %s62 = int_to_ptr.vmem [resolvable:$true] %s61
      %64 = dma.hbm_to_vmem [thread:$0]  %s60, 16, %s62, [#allocation6]
    $region37: #{tpu_custom_call.1} parent=1 // pred_fallthru
      _
    // Predicated region
    $region38: #{tpu_custom_call.1} parent=1 // pred_check
      _
    $region39: #{tpu_custom_call.1} parent=1 // pred_check_branch
      %66 = sbr.rel (0) target = $region41
    $region40: #{tpu_custom_call.1} parent=1 // pred_region
      _
    $region41: #{tpu_custom_call.1} parent=1 // pred_fallthru
      _
    // Predicated region
    $region42: #{tpu_custom_call.1} parent=1 // pred_check
      _
    $region43: #{tpu_custom_call.1} parent=1 // pred_check_branch
      %68 = sbr.rel (0) target = $region45
    $region44: #{tpu_custom_call.1} parent=1 // pred_region
      %70 = vsyncadd [#allocation6], 0
      %s72 = sshll.u32 %s10, 4
      %s73 = int_to_ptr.hbm [resolvable:$true] %s72
      %s74 = sshll.u32 [#allocation7], 4
      %s75 = int_to_ptr.vmem [resolvable:$true] %s74
      %77 = dma.hbm_to_vmem [thread:$0]  %s73, 16, %s75, [#allocation6]
    $region45: #{tpu_custom_call.1} parent=1 // pred_fallthru
      _
    // Predicated region
    $region46: #{tpu_custom_call.1} parent=1 // pred_check
      _
    $region47: #{tpu_custom_call.1} parent=1 // pred_check_branch
      %79 = sbr.rel (0) target = $region49
    $region48: #{tpu_custom_call.1} parent=1 // pred_region
      _
    $region49: #{tpu_custom_call.1} parent=1 // pred_fallthru
      _
    // Predicated region
    $region50: #{tpu_custom_call.1} parent=1 // pred_check
      _
    $region51: #{tpu_custom_call.1} parent=1 // pred_check_branch
      %81 = sbr.rel (0) target = $region53
    $region52: #{tpu_custom_call.1} parent=1 // pred_region
      _
    $region53: #{tpu_custom_call.1} parent=1 // pred_fallthru
      _
    // Predicated region
    $region54: #{tpu_custom_call.1} parent=1 // pred_check
      _
    $region55: #{tpu_custom_call.1} parent=1 // pred_check_branch
      %83 = sbr.rel (0) target = $region57
    $region56: #{tpu_custom_call.1} parent=1 // pred_region
      _
    $region57: #{tpu_custom_call.1} parent=1 // pred_fallthru
      _
    // Predicated region
    $region58: #{tpu_custom_call.1} parent=1 // pred_check
      _
    $region59: #{tpu_custom_call.1} parent=1 // pred_check_branch
      %85 = sbr.rel (0) target = $region61
    $region60: #{tpu_custom_call.1} parent=1 // pred_region
      _
    $region61: #{tpu_custom_call.1} parent=1 // pred_fallthru
      _
    // Predicated region
    $region62: #{tpu_custom_call.1} parent=1 // pred_check
      _
    $region63: #{tpu_custom_call.1} parent=1 // pred_check_branch
      %87 = sbr.rel (0) target = $region65
    $region64: #{tpu_custom_call.1} parent=1 // pred_region
      _
    $region65: #{tpu_custom_call.1} parent=1 // pred_fallthru
      _
    // Predicated region
    $region66: #{tpu_custom_call.1} parent=1 // pred_check
      _
    $region67: #{tpu_custom_call.1} parent=1 // pred_check_branch
      %89 = sbr.rel (0) target = $region69
    $region68: #{tpu_custom_call.1} parent=1 // pred_region
      _
    $region69: #{tpu_custom_call.1} parent=1 // pred_fallthru
      _
    // Predicated region
    $region70: #{tpu_custom_call.1} parent=1 // pred_check
      _
    $region71: #{tpu_custom_call.1} parent=1 // pred_check_branch
      %91 = sbr.rel (0) target = $region73
    $region72: #{tpu_custom_call.1} parent=1 // pred_region
      _
    $region73: #{tpu_custom_call.1} parent=1 // pred_fallthru
      _
    // Predicated region
    $region74: #{tpu_custom_call.1} parent=1 // pred_check
      _
    $region75: #{tpu_custom_call.1} parent=1 // pred_check_branch
      %93 = sbr.rel (0) target = $region77
    $region76: #{tpu_custom_call.1} parent=1 // pred_region
      _
    $region77: #{tpu_custom_call.1} parent=1 // pred_fallthru
      _
    // Predicated region
    $region78: #{tpu_custom_call.1} parent=1 // pred_check
      _
    $region79: #{tpu_custom_call.1} parent=1 // pred_check_branch
      %95 = sbr.rel (0) target = $region81
    $region80: #{tpu_custom_call.1} parent=1 // pred_region
      %97 = dma.done [#allocation3], 128
    $region81: #{tpu_custom_call.1} parent=1 // pred_fallthru
      _
    // Predicated region
    $region82: #{tpu_custom_call.1} parent=1 // pred_check
      _
    $region83: #{tpu_custom_call.1} parent=1 // pred_check_branch
      %99 = sbr.rel (0) target = $region85
    $region84: #{tpu_custom_call.1} parent=1 // pred_region
      %101 = dma.done [#allocation6], 16
    $region85: #{tpu_custom_call.1} parent=1 // pred_fallthru
      _
    // Predicated region
    $region86: #{tpu_custom_call.1} parent=1 // pred_check
      _
    $region87: #{tpu_custom_call.1} parent=1 // pred_check_branch
      %103 = sbr.rel (0) target = $region89
    $region88: #{tpu_custom_call.1} parent=1 // pred_region
      %105 = dma.done [#allocation6], 16
    $region89: #{tpu_custom_call.1} parent=1 // pred_fallthru
      _
    %v107 = vld [vmem:[%s2] sm:$0xff]
    %v108 = vld [vmem:[%s2 + $0x8] sm:$0xf]
    %vm109 = vcmp.gt.f32.partialorder %v107, 0.0
    %vm110 = vcmp.gt.f32.partialorder %v108, 0.0
    %v111 = vsel %vm109, 0.0, -1e+30
    %v112 = vsel %vm110, 0.0, -1e+30
    %vm113 = vcmask 64512
    %v114 = vsel %vm113, %v107, 0.0
    %115 = vadd.xlane.f32.xlu0 %v114
    %v116 = vpop.xlane.xlu0 %115
    %vm117 = vcmask 60416
    %v118 = vsel %vm117, %v108, 0.0
    %119 = vadd.xlane.f32.xlu0 %v118
    %v120 = vpop.xlane.xlu0 %119
    %vm121 = vcmp.gt.f32.partialorder %v116, 0.0
    %vm122 = vcmp.gt.f32.partialorder %v120, 0.0
    %v123 = vsel %vm121, 1.0, 0.0
    %v124 = vsel %vm122, 1.0, 0.0
    %v125 = vld [vmem:[%s3] sm:$0xff]
    %vm126 = vcmp.gt.f32.partialorder %v125, 0.0
    %v127 = vsel %vm126, 0.0, -1e+30
    %vm128 = vcmask 97280
    %v129 = vsel %vm128, %v125, 0.0
    %130 = vadd.xlane.f32.xlu0 %v129
    %v131 = vpop.xlane.xlu0 %130
    %vm132 = vcmp.gt.f32.partialorder %v131, 0.0
    %v133 = vsel %vm132, 1.0, 0.0
    %v134 = vld [vmem:[%s4] sm:$0xff]
    %v135 = vld [vmem:[%s4 + $0x8] sm:$0xf]
    %vm136 = vcmp.gt.f32.partialorder %v134, 0.0
    %vm137 = vcmp.gt.f32.partialorder %v135, 0.0
    %v138 = vsel %vm136, 0.0, -1e+30
    %v139 = vsel %vm137, 0.0, -1e+30
    %v140 = vsel %vm128, %v134, 0.0
    %141 = vadd.xlane.f32.xlu0 %v140
    %v142 = vpop.xlane.xlu0 %141
    %vm143 = vcmask 93184
    %v144 = vsel %vm143, %v135, 0.0
    %145 = vadd.xlane.f32.xlu0 %v144
    %v146 = vpop.xlane.xlu0 %145
    %vm147 = vcmp.gt.f32.partialorder %v142, 0.0
    %vm148 = vcmp.gt.f32.partialorder %v146, 0.0
    %v149 = vsel %vm147, 1.0, 0.0
    %v150 = vsel %vm148, 1.0, 0.0
    %v151 = vld [vmem:[%s0] sm:$0xff]
    %v152 = vld [vmem:[%s1] sm:$0xff]
    %v153 = vld [vmem:[%s1 + $0x8] sm:$0xf]
    %v154 = vld [vmem:[%s9] sm:$0xff]
    %v155 = vld [vmem:[%s9 + $0x8] sm:$0xff]
    %v156 = vld [vmem:[%s9 + $0x10] sm:$0xff]
    %v157 = vld [vmem:[%s9 + $0x18] sm:$0xff]
    %v158 = vld [vmem:[#allocation7] sm:$0x1]
    %v159 = vld [vmem:[%s11] sm:$0xff]
    %v160 = vld [vmem:[%s11 + $0x8] sm:$0xff]
    %v161 = vld [vmem:[%s11 + $0x10] sm:$0xff]
    %v162 = vld [vmem:[%s11 + $0x18] sm:$0xff]
    %v163 = vpack.c.bf16 %v151, %v151
    %v164 = vld [vmem:[%s5] sm:$0xf]
    %v165 = vld [vmem:[%s5 + $0x4] sm:$0xf]
    %v166 = vld [vmem:[%s6] sm:$0x1]
    %v168 = vperm.slane %v166, 0
    %v172 = vunpack.c.l.b16 %v164
    %v173 = vunpack.c.l.b16 %v165
    %v174 = vpack.c.b16 %v173, %v172
    %vm176 = vcmask 130048
    %v178 = vsel %vm176, %v163, 0
    %180 = vmatpush.bf16.msra.mxu0 0
    %181 = vmatpush.bf16.msra.mxu0 0
    %182 = vmatpush.bf16.msra.mxu0 0
    %183 = vmatpush.bf16.msra.mxu0 0
    %184 = vmatpush.bf16.msra.mxu0 0
    %185 = vmatpush.bf16.msra.mxu0 0
    %186 = vmatpush.bf16.msra.mxu0 0
    %187 = vmatpush.bf16.msra.mxu0 %v174
    %188 = vmatmul.bf16.gmra.mxu0 %v178
    %v189 = vpop.f32.mrf.mxu0
    %v190 = vadd.f32 %v168, %v189
    %v191 = vpop.f32.mrf.mxu0
    %192 = vdwg.mxu0
    %v193 = vpack.c.bf16 %v190, %v190
    %v194 = vpack.c.bf16 %v153, %v152
    %v195 = vld [vmem:[#allocation2] sm:$0xf]
    %v196 = vld [vmem:[#allocation2 + $0x4] sm:$0xf]
    %v197 = vld [vmem:[#allocation5] sm:$0x1]
    %v199 = vperm.slane %v197, 0
    %v203 = vunpack.c.l.b16 %v195
    %v204 = vunpack.c.l.b16 %v196
    %v205 = vpack.c.b16 %v204, %v203
    %v208 = vsel %vm176, %v194, 0
    %210 = vmatpush.bf16.msra.mxu0 0
    %211 = vmatpush.bf16.msra.mxu0 0
    %212 = vmatpush.bf16.msra.mxu0 0
    %213 = vmatpush.bf16.msra.mxu0 0
    %214 = vmatpush.bf16.msra.mxu0 0
    %215 = vmatpush.bf16.msra.mxu0 0
    %216 = vmatpush.bf16.msra.mxu0 0
    %217 = vmatpush.bf16.msra.mxu0 %v205
    %218 = vmatmul.bf16.gmra.mxu0 %v208
    %v219 = vpop.f32.mrf.mxu0
    %v220 = vadd.f32 %v199, %v219
    %v221 = vpop.f32.mrf.mxu0
    %v222 = vadd.f32 %v199, %v221
    %223 = vdwg.mxu0
    %v224 = vpack.c.bf16 %v220, %v220
    %v225 = vpack.c.bf16 %v222, %v222
    %227 = vrot.lane.b32.xlu0 %v190, 96
    %v228 = vpop.permute.xlu0 %227
    %230 = vxpose.xlu0.b32.start [1/16] %v228, 128
    %231 = vxpose.xlu0.b32.cont [2/16] 0.0, 128
    %232 = vxpose.xlu0.b32.cont [3/16] 0.0, 128
    %233 = vxpose.xlu0.b32.cont [4/16] 0.0, 128
    %234 = vxpose.xlu0.b32.cont [5/16] 0.0, 128
    %235 = vxpose.xlu0.b32.cont [6/16] 0.0, 128
    %236 = vxpose.xlu0.b32.cont [7/16] 0.0, 128
    %237 = vxpose.xlu0.b32.cont [8/16] 0.0, 128
    %238 = vxpose.xlu0.b32.cont [9/16] 0.0, 128
    %239 = vxpose.xlu0.b32.cont [10/16] 0.0, 128
    %240 = vxpose.xlu0.b32.cont [11/16] 0.0, 128
    %241 = vxpose.xlu0.b32.cont [12/16] 0.0, 128
    %242 = vxpose.xlu0.b32.cont [13/16] 0.0, 128
    %243 = vxpose.xlu0.b32.cont [14/16] 0.0, 128
    %244 = vxpose.xlu0.b32.cont [15/16] 0.0, 128
    %245 = vxpose.xlu0.b32.end [16/16] 0.0, 128
    %v246 = vpop.trf.xlu0
    %v247 = vpop.trf.xlu0
    %v248 = vpop.trf.xlu0
    %v249 = vpop.trf.xlu0
    %v250 = vpop.trf.xlu0
    %v251 = vpop.trf.xlu0
    %v252 = vpop.trf.xlu0
    %v253 = vpop.trf.xlu0
    %v254 = vpop.trf.xlu0
    %v255 = vpop.trf.xlu0
    %v256 = vpop.trf.xlu0
    %v257 = vpop.trf.xlu0
    %v258 = vpop.trf.xlu0
    %v259 = vpop.trf.xlu0
    %v260 = vpop.trf.xlu0
    %v261 = vpop.trf.xlu0
    %263 = vset.pattern.permute.xlu0 40
    %264 = vperm.xlu0 %263, %v220
    %v265 = vpop.permute.xlu0 %264
    %268 = vset.pattern.permute.xlu0 40
    %269 = vperm.xlu0 %268, %v222
    %v270 = vpop.permute.xlu0 %269
    %v272 = vperm.slane %v246, 0
    %v273 = vadd.f32 %v265, %v272
    %v274 = vadd.f32 %v270, %v272
    %v275 = vmul.f32 %v273, 0.2
    %v276 = vmul.f32 %v274, 0.2
    %v277 = vmax.f32 %v273, %v275
    %v278 = vmax.f32 %v274, %v276
    %v279 = vadd.f32 %v277, %v111
    %v280 = vadd.f32 %v278, %v112
    %v281 = vsel %vm113, %v279, -inf
    %282 = vmax.xlane.f32.xlu0 %v281
    %v283 = vpop.xlane.xlu0 %282
    %v284 = vsel %vm117, %v280, -inf
    %285 = vmax.xlane.f32.xlu0 %v284
    %v286 = vpop.xlane.xlu0 %285
    %v287 = vsub.f32 %v279, %v283
    %v288 = vsub.f32 %v280, %v286
    %v289 = vmul.f32 %v287, 1.442695
    %v290 = vpow.pop %v289
    %v291 = vmul.f32 %v288, 1.442695
    %v292 = vpow.pop %v291
    %v293 = vsel %vm113, %v290, 0.0
    %294 = vadd.xlane.f32.xlu0 %v293
    %v295 = vpop.xlane.xlu0 %294
    %v296 = vsel %vm117, %v292, 0.0
    %297 = vadd.xlane.f32.xlu0 %v296
    %v298 = vpop.xlane.xlu0 %297
    %v299 = vrcp.pop %v295
    %v300 = vrcp.pop %v298
    %v301 = vpack.c.bf16 %v292, %v290
    %v303 = vsel %vm113, %v301, 0
    %vm305 = vcmask 1043456
    %v307 = vsel %vm305, %v193, 0
    %309 = vmatpush.bf16.msra.mxu0 0
    %310 = vmatpush.bf16.msra.mxu0 0
    %311 = vmatpush.bf16.msra.mxu0 0
    %312 = vmatpush.bf16.msra.mxu0 0
    %313 = vmatpush.bf16.msra.mxu0 0
    %314 = vmatpush.bf16.msra.mxu0 0
    %315 = vmatpush.bf16.msra.mxu0 0
    %316 = vmatpush.bf16.msra.mxu0 %v307
    %317 = vmatmul.bf16.gmra.mxu0 %v303
    %v318 = vpop.f32.mrf.mxu0
    %v319 = vadd.f32 0.0, %v318
    %v320 = vpop.f32.mrf.mxu0
    %v321 = vadd.f32 0.0, %v320
    %322 = vdwg.mxu0
    %v323 = vmul.f32 %v319, %v299
    %v324 = vmul.f32 %v321, %v300
    %325 = vset.pattern.permute.xlu0 41
    %326 = vperm.xlu0 %325, %v220
    %v327 = vpop.permute.xlu0 %326
    %329 = vset.pattern.permute.xlu0 41
    %330 = vperm.xlu0 %329, %v222
    %v331 = vpop.permute.xlu0 %330
    %v333 = vperm.slane %v246, 1
    %v334 = vadd.f32 %v327, %v333
    %v335 = vadd.f32 %v331, %v333
    %v336 = vmul.f32 %v334, 0.2
    %v337 = vmul.f32 %v335, 0.2
    %v338 = vmax.f32 %v334, %v336
    %v339 = vmax.f32 %v335, %v337
    %v340 = vadd.f32 %v338, %v111
    %v341 = vadd.f32 %v339, %v112
    %v342 = vsel %vm113, %v340, -inf
    %343 = vmax.xlane.f32.xlu0 %v342
    %v344 = vpop.xlane.xlu0 %343
    %v345 = vsel %vm117, %v341, -inf
    %346 = vmax.xlane.f32.xlu0 %v345
    %v347 = vpop.xlane.xlu0 %346
    %v348 = vsub.f32 %v340, %v344
    %v349 = vsub.f32 %v341, %v347
    %v350 = vmul.f32 %v348, 1.442695
    %v351 = vpow.pop %v350
    %v352 = vmul.f32 %v349, 1.442695
    %v353 = vpow.pop %v352
    %v354 = vsel %vm113, %v351, 0.0
    %355 = vadd.xlane.f32.xlu0 %v354
    %v356 = vpop.xlane.xlu0 %355
    %v357 = vsel %vm117, %v353, 0.0
    %358 = vadd.xlane.f32.xlu0 %v357
    %v359 = vpop.xlane.xlu0 %358
    %v360 = vrcp.pop %v356
    %v361 = vrcp.pop %v359
    %v362 = vpack.c.bf16 %v353, %v351
    %v364 = vunpack.c.l.b16 %v193
    %v365 = vpack.c.b16 %v364, %v364
    %366 = vrot.lane.b32.xlu0 %v365, 120
    %v367 = vpop.permute.xlu0 %366
    %v369 = vsel %vm113, %v362, 0
    %v372 = vsel %vm305, %v367, 0
    %374 = vmatpush.bf16.msra.mxu0 0
    %375 = vmatpush.bf16.msra.mxu0 0
    %376 = vmatpush.bf16.msra.mxu0 0
    %377 = vmatpush.bf16.msra.mxu0 0
    %378 = vmatpush.bf16.msra.mxu0 0
    %379 = vmatpush.bf16.msra.mxu0 0
    %380 = vmatpush.bf16.msra.mxu0 0
    %381 = vmatpush.bf16.msra.mxu0 %v372
    %382 = vmatmul.bf16.gmra.mxu0 %v369
    %v383 = vpop.f32.mrf.mxu0
    %v384 = vadd.f32 0.0, %v383
    %v385 = vpop.f32.mrf.mxu0
    %v386 = vadd.f32 0.0, %v385
    %387 = vdwg.mxu0
    %v388 = vmul.f32 %v384, %v360
    %v389 = vmul.f32 %v386, %v361
    %390 = vset.pattern.permute.xlu0 42
    %391 = vperm.xlu0 %390, %v220
    %v392 = vpop.permute.xlu0 %391
    %394 = vset.pattern.permute.xlu0 42
    %395 = vperm.xlu0 %394, %v222
    %v396 = vpop.permute.xlu0 %395
    %v398 = vperm.slane %v246, 2
    %v399 = vadd.f32 %v392, %v398
    %v400 = vadd.f32 %v396, %v398
    %v401 = vmul.f32 %v399, 0.2
    %v402 = vmul.f32 %v400, 0.2
    %v403 = vmax.f32 %v399, %v401
    %v404 = vmax.f32 %v400, %v402
    %v405 = vadd.f32 %v403, %v111
    %v406 = vadd.f32 %v404, %v112
    %v407 = vsel %vm113, %v405, -inf
    %408 = vmax.xlane.f32.xlu0 %v407
    %v409 = vpop.xlane.xlu0 %408
    %v410 = vsel %vm117, %v406, -inf
    %411 = vmax.xlane.f32.xlu0 %v410
    %v412 = vpop.xlane.xlu0 %411
    %v413 = vsub.f32 %v405, %v409
    %v414 = vsub.f32 %v406, %v412
    %v415 = vmul.f32 %v413, 1.442695
    %v416 = vpow.pop %v415
    %v417 = vmul.f32 %v414, 1.442695
    %v418 = vpow.pop %v417
    %v419 = vsel %vm113, %v416, 0.0
    %420 = vadd.xlane.f32.xlu0 %v419
    %v421 = vpop.xlane.xlu0 %420
    %v422 = vsel %vm117, %v418, 0.0
    %423 = vadd.xlane.f32.xlu0 %v422
    %v424 = vpop.xlane.xlu0 %423
    %v425 = vrcp.pop %v421
    %v426 = vrcp.pop %v424
    %v427 = vpack.c.bf16 %v418, %v416
    %428 = vrot.lane.b32.xlu0 %v365, 112
    %v429 = vpop.permute.xlu0 %428
    %v431 = vsel %vm113, %v427, 0
    %v434 = vsel %vm305, %v429, 0
    %436 = vmatpush.bf16.msra.mxu0 0
    %437 = vmatpush.bf16.msra.mxu0 0
    %438 = vmatpush.bf16.msra.mxu0 0
    %439 = vmatpush.bf16.msra.mxu0 0
    %440 = vmatpush.bf16.msra.mxu0 0
    %441 = vmatpush.bf16.msra.mxu0 0
    %442 = vmatpush.bf16.msra.mxu0 0
    %443 = vmatpush.bf16.msra.mxu0 %v434
    %444 = vmatmul.bf16.gmra.mxu0 %v431
    %v445 = vpop.f32.mrf.mxu0
    %v446 = vadd.f32 0.0, %v445
    %v447 = vpop.f32.mrf.mxu0
    %v448 = vadd.f32 0.0, %v447
    %449 = vdwg.mxu0
    %v450 = vmul.f32 %v446, %v425
    %v451 = vmul.f32 %v448, %v426
    %452 = vset.pattern.permute.xlu0 43
    %453 = vperm.xlu0 %452, %v220
    %v454 = vpop.permute.xlu0 %453
    %456 = vset.pattern.permute.xlu0 43
    %457 = vperm.xlu0 %456, %v222
    %v458 = vpop.permute.xlu0 %457
    %v460 = vperm.slane %v246, 3
    %v461 = vadd.f32 %v454, %v460
    %v462 = vadd.f32 %v458, %v460
    %v463 = vmul.f32 %v461, 0.2
    %v464 = vmul.f32 %v462, 0.2
    %v465 = vmax.f32 %v461, %v463
    %v466 = vmax.f32 %v462, %v464
    %v467 = vadd.f32 %v465, %v111
    %v468 = vadd.f32 %v466, %v112
    %v469 = vsel %vm113, %v467, -inf
    %470 = vmax.xlane.f32.xlu0 %v469
    %v471 = vpop.xlane.xlu0 %470
    %v472 = vsel %vm117, %v468, -inf
    %473 = vmax.xlane.f32.xlu0 %v472
    %v474 = vpop.xlane.xlu0 %473
    %v475 = vsub.f32 %v467, %v471
    %v476 = vsub.f32 %v468, %v474
    %v477 = vmul.f32 %v475, 1.442695
    %v478 = vpow.pop %v477
    %v479 = vmul.f32 %v476, 1.442695
    %v480 = vpow.pop %v479
    %v481 = vsel %vm113, %v478, 0.0
    %482 = vadd.xlane.f32.xlu0 %v481
    %v483 = vpop.xlane.xlu0 %482
    %v484 = vsel %vm117, %v480, 0.0
    %485 = vadd.xlane.f32.xlu0 %v484
    %v486 = vpop.xlane.xlu0 %485
    %v487 = vrcp.pop %v483
    %v488 = vrcp.pop %v486
    %v489 = vpack.c.bf16 %v480, %v478
    %490 = vrot.lane.b32.xlu0 %v365, 104
    %v491 = vpop.permute.xlu0 %490
    %v493 = vsel %vm113, %v489, 0
    %v496 = vsel %vm305, %v491, 0
    %498 = vmatpush.bf16.msra.mxu0 0
    %499 = vmatpush.bf16.msra.mxu0 0
    %500 = vmatpush.bf16.msra.mxu0 0
    %501 = vmatpush.bf16.msra.mxu0 0
    %502 = vmatpush.bf16.msra.mxu0 0
    %503 = vmatpush.bf16.msra.mxu0 0
    %504 = vmatpush.bf16.msra.mxu0 0
    %505 = vmatpush.bf16.msra.mxu0 %v496
    %506 = vmatmul.bf16.gmra.mxu0 %v493
    %v507 = vpop.f32.mrf.mxu0
    %v508 = vadd.f32 0.0, %v507
    %v509 = vpop.f32.mrf.mxu0
    %v510 = vadd.f32 0.0, %v509
    %511 = vdwg.mxu0
    %v512 = vmul.f32 %v508, %v487
    %v513 = vmul.f32 %v510, %v488
    %516 = vrot.lane.b32.xlu0 %v388, 8
    %v517 = vpop.permute.xlu0 %516
    %518 = vrot.lane.b32.xlu0 %v389, 8
    %v519 = vpop.permute.xlu0 %518
    %524 = vrot.lane.b32.xlu0 %v450, 16
    %v525 = vpop.permute.xlu0 %524
    %526 = vrot.lane.b32.xlu0 %v451, 16
    %v527 = vpop.permute.xlu0 %526
    %532 = vrot.lane.b32.xlu0 %v512, 24
    %v533 = vpop.permute.xlu0 %532
    %534 = vrot.lane.b32.xlu0 %v513, 24
    %v535 = vpop.permute.xlu0 %534
    %v538 = vsel %vm113, %v323, %v517
    %v539 = vsel %vm113, %v324, %v519
    %v540 = vsel %vm176, %v538, %v525
    %v541 = vsel %vm176, %v539, %v527
    %vm542 = vcmask 195584
    %v543 = vsel %vm542, %v540, %v533
    %v544 = vsel %vm542, %v541, %v535
    %v545 = vmax.f32 %v543, 0.0
    %v546 = vmax.f32 %v544, 0.0
    %v547 = vmul.f32 %v545, %v123
    %v548 = vmul.f32 %v546, %v124
    %549 = vrot.lane.b32.xlu0 %v220, 96
    %v550 = vpop.permute.xlu0 %549
    %551 = vrot.lane.b32.xlu0 %v222, 96
    %v552 = vpop.permute.xlu0 %551
    %555 = vxpose.xlu0.b32.start [1/16] %v550, 128
    %556 = vxpose.xlu0.b32.cont [2/16] %v552, 128
    %557 = vxpose.xlu0.b32.cont [3/16] 0.0, 128
    %558 = vxpose.xlu0.b32.cont [4/16] 0.0, 128
    %559 = vxpose.xlu0.b32.cont [5/16] 0.0, 128
    %560 = vxpose.xlu0.b32.cont [6/16] 0.0, 128
    %561 = vxpose.xlu0.b32.cont [7/16] 0.0, 128
    %562 = vxpose.xlu0.b32.cont [8/16] 0.0, 128
    %563 = vxpose.xlu0.b32.cont [9/16] 0.0, 128
    %564 = vxpose.xlu0.b32.cont [10/16] 0.0, 128
    %565 = vxpose.xlu0.b32.cont [11/16] 0.0, 128
    %566 = vxpose.xlu0.b32.cont [12/16] 0.0, 128
    %567 = vxpose.xlu0.b32.cont [13/16] 0.0, 128
    %568 = vxpose.xlu0.b32.cont [14/16] 0.0, 128
    %569 = vxpose.xlu0.b32.cont [15/16] 0.0, 128
    %570 = vxpose.xlu0.b32.end [16/16] 0.0, 128
    %v571 = vpop.trf.xlu0
    %v572 = vpop.trf.xlu0
    %v573 = vpop.trf.xlu0
    %v574 = vpop.trf.xlu0
    %v575 = vpop.trf.xlu0
    %v576 = vpop.trf.xlu0
    %v577 = vpop.trf.xlu0
    %v578 = vpop.trf.xlu0
    %v579 = vpop.trf.xlu0
    %v580 = vpop.trf.xlu0
    %v581 = vpop.trf.xlu0
    %v582 = vpop.trf.xlu0
    %v583 = vpop.trf.xlu0
    %v584 = vpop.trf.xlu0
    %v585 = vpop.trf.xlu0
    %v586 = vpop.trf.xlu0
    %587 = vset.pattern.permute.xlu0 36
    %588 = vperm.xlu0 %587, %v190
    %v589 = vpop.permute.xlu0 %588
    %v591 = vperm.slane %v571, 0
    %v592 = vadd.f32 %v589, %v591
    %v593 = vmul.f32 %v592, 0.2
    %v594 = vmax.f32 %v592, %v593
    %v595 = vadd.f32 %v594, %v127
    %v596 = vsel %vm128, %v595, -inf
    %597 = vmax.xlane.f32.xlu0 %v596
    %v598 = vpop.xlane.xlu0 %597
    %v599 = vsub.f32 %v595, %v598
    %v600 = vmul.f32 %v599, 1.442695
    %v601 = vpow.pop %v600
    %v602 = vsel %vm128, %v601, 0.0
    %603 = vadd.xlane.f32.xlu0 %v602
    %v604 = vpop.xlane.xlu0 %603
    %v605 = vrcp.pop %v604
    %v606 = vpack.c.bf16 %v601, %v601
    %v609 = vunpack.c.l.b16 %v224
    %v610 = vunpack.c.l.b16 %v225
    %v611 = vpack.c.b16 %v610, %v609
    %v613 = vsel %vm128, %v606, 0
    %vm615 = vcmask 1045504
    %v617 = vsel %vm615, %v611, 0
    %619 = vmatpush.bf16.msra.mxu0 0
    %620 = vmatpush.bf16.msra.mxu0 0
    %621 = vmatpush.bf16.msra.mxu0 0
    %622 = vmatpush.bf16.msra.mxu0 0
    %623 = vmatpush.bf16.msra.mxu0 0
    %624 = vmatpush.bf16.msra.mxu0 0
    %625 = vmatpush.bf16.msra.mxu0 0
    %626 = vmatpush.bf16.msra.mxu0 %v617
    %627 = vmatmul.bf16.gmra.mxu0 %v613
    %v628 = vpop.f32.mrf.mxu0
    %v629 = vadd.f32 0.0, %v628
    %v630 = vpop.f32.mrf.mxu0
    %631 = vdwg.mxu0
    %v632 = vmul.f32 %v629, %v605
    %633 = vset.pattern.permute.xlu0 37
    %634 = vperm.xlu0 %633, %v190
    %v635 = vpop.permute.xlu0 %634
    %v637 = vperm.slane %v571, 1
    %v638 = vadd.f32 %v635, %v637
    %v639 = vmul.f32 %v638, 0.2
    %v640 = vmax.f32 %v638, %v639
    %v641 = vadd.f32 %v640, %v127
    %v642 = vsel %vm128, %v641, -inf
    %643 = vmax.xlane.f32.xlu0 %v642
    %v644 = vpop.xlane.xlu0 %643
    %v645 = vsub.f32 %v641, %v644
    %v646 = vmul.f32 %v645, 1.442695
    %v647 = vpow.pop %v646
    %v648 = vsel %vm128, %v647, 0.0
    %649 = vadd.xlane.f32.xlu0 %v648
    %v650 = vpop.xlane.xlu0 %649
    %v651 = vrcp.pop %v650
    %v652 = vpack.c.bf16 %v647, %v647
    %653 = vrot.lane.b32.xlu0 %v611, 120
    %v654 = vpop.permute.xlu0 %653
    %v656 = vsel %vm128, %v652, 0
    %v659 = vsel %vm615, %v654, 0
    %661 = vmatpush.bf16.msra.mxu0 0
    %662 = vmatpush.bf16.msra.mxu0 0
    %663 = vmatpush.bf16.msra.mxu0 0
    %664 = vmatpush.bf16.msra.mxu0 0
    %665 = vmatpush.bf16.msra.mxu0 0
    %666 = vmatpush.bf16.msra.mxu0 0
    %667 = vmatpush.bf16.msra.mxu0 0
    %668 = vmatpush.bf16.msra.mxu0 %v659
    %669 = vmatmul.bf16.gmra.mxu0 %v656
    %v670 = vpop.f32.mrf.mxu0
    %v671 = vadd.f32 0.0, %v670
    %v672 = vpop.f32.mrf.mxu0
    %673 = vdwg.mxu0
    %v674 = vmul.f32 %v671, %v651
    %675 = vset.pattern.permute.xlu0 38
    %676 = vperm.xlu0 %675, %v190
    %v677 = vpop.permute.xlu0 %676
    %v679 = vperm.slane %v571, 2
    %v680 = vadd.f32 %v677, %v679
    %v681 = vmul.f32 %v680, 0.2
    %v682 = vmax.f32 %v680, %v681
    %v683 = vadd.f32 %v682, %v127
    %v684 = vsel %vm128, %v683, -inf
    %685 = vmax.xlane.f32.xlu0 %v684
    %v686 = vpop.xlane.xlu0 %685
    %v687 = vsub.f32 %v683, %v686
    %v688 = vmul.f32 %v687, 1.442695
    %v689 = vpow.pop %v688
    %v690 = vsel %vm128, %v689, 0.0
    %691 = vadd.xlane.f32.xlu0 %v690
    %v692 = vpop.xlane.xlu0 %691
    %v693 = vrcp.pop %v692
    %v694 = vpack.c.bf16 %v689, %v689
    %695 = vrot.lane.b32.xlu0 %v611, 112
    %v696 = vpop.permute.xlu0 %695
    %v698 = vsel %vm128, %v694, 0
    %v701 = vsel %vm615, %v696, 0
    %703 = vmatpush.bf16.msra.mxu0 0
    %704 = vmatpush.bf16.msra.mxu0 0
    %705 = vmatpush.bf16.msra.mxu0 0
    %706 = vmatpush.bf16.msra.mxu0 0
    %707 = vmatpush.bf16.msra.mxu0 0
    %708 = vmatpush.bf16.msra.mxu0 0
    %709 = vmatpush.bf16.msra.mxu0 0
    %710 = vmatpush.bf16.msra.mxu0 %v701
    %711 = vmatmul.bf16.gmra.mxu0 %v698
    %v712 = vpop.f32.mrf.mxu0
    %v713 = vadd.f32 0.0, %v712
    %v714 = vpop.f32.mrf.mxu0
    %715 = vdwg.mxu0
    %v716 = vmul.f32 %v713, %v693
    %717 = vset.pattern.permute.xlu0 39
    %718 = vperm.xlu0 %717, %v190
    %v719 = vpop.permute.xlu0 %718
    %v721 = vperm.slane %v571, 3
    %v722 = vadd.f32 %v719, %v721
    %v723 = vmul.f32 %v722, 0.2
    %v724 = vmax.f32 %v722, %v723
    %v725 = vadd.f32 %v724, %v127
    %v726 = vsel %vm128, %v725, -inf
    %727 = vmax.xlane.f32.xlu0 %v726
    %v728 = vpop.xlane.xlu0 %727
    %v729 = vsub.f32 %v725, %v728
    %v730 = vmul.f32 %v729, 1.442695
    %v731 = vpow.pop %v730
    %v732 = vsel %vm128, %v731, 0.0
    %733 = vadd.xlane.f32.xlu0 %v732
    %v734 = vpop.xlane.xlu0 %733
    %v735 = vrcp.pop %v734
    %v736 = vpack.c.bf16 %v731, %v731
    %737 = vrot.lane.b32.xlu0 %v611, 104
    %v738 = vpop.permute.xlu0 %737
    %v740 = vsel %vm128, %v736, 0
    %v743 = vsel %vm615, %v738, 0
    %745 = vmatpush.bf16.msra.mxu0 0
    %746 = vmatpush.bf16.msra.mxu0 0
    %747 = vmatpush.bf16.msra.mxu0 0
    %748 = vmatpush.bf16.msra.mxu0 0
    %749 = vmatpush.bf16.msra.mxu0 0
    %750 = vmatpush.bf16.msra.mxu0 0
    %751 = vmatpush.bf16.msra.mxu0 0
    %752 = vmatpush.bf16.msra.mxu0 %v743
    %753 = vmatmul.bf16.gmra.mxu0 %v740
    %v754 = vpop.f32.mrf.mxu0
    %v755 = vadd.f32 0.0, %v754
    %v756 = vpop.f32.mrf.mxu0
    %757 = vdwg.mxu0
    %v758 = vmul.f32 %v755, %v735
    %760 = vrot.lane.b32.xlu0 %v674, 8
    %v761 = vpop.permute.xlu0 %760
    %764 = vrot.lane.b32.xlu0 %v716, 16
    %v765 = vpop.permute.xlu0 %764
    %768 = vrot.lane.b32.xlu0 %v758, 24
    %v769 = vpop.permute.xlu0 %768
    %v771 = vsel %vm113, %v632, %v761
    %v772 = vsel %vm176, %v771, %v765
    %v773 = vsel %vm542, %v772, %v769
    %v774 = vmax.f32 %v773, 0.0
    %v775 = vmul.f32 %v774, %v133
    %776 = vrot.lane.b32.xlu0 %v220, 92
    %v777 = vpop.permute.xlu0 %776
    %778 = vrot.lane.b32.xlu0 %v222, 92
    %v779 = vpop.permute.xlu0 %778
    %782 = vxpose.xlu0.b32.start [1/16] %v777, 128
    %783 = vxpose.xlu0.b32.cont [2/16] %v779, 128
    %784 = vxpose.xlu0.b32.cont [3/16] 0.0, 128
    %785 = vxpose.xlu0.b32.cont [4/16] 0.0, 128
    %786 = vxpose.xlu0.b32.cont [5/16] 0.0, 128
    %787 = vxpose.xlu0.b32.cont [6/16] 0.0, 128
    %788 = vxpose.xlu0.b32.cont [7/16] 0.0, 128
    %789 = vxpose.xlu0.b32.cont [8/16] 0.0, 128
    %790 = vxpose.xlu0.b32.cont [9/16] 0.0, 128
    %791 = vxpose.xlu0.b32.cont [10/16] 0.0, 128
    %792 = vxpose.xlu0.b32.cont [11/16] 0.0, 128
    %793 = vxpose.xlu0.b32.cont [12/16] 0.0, 128
    %794 = vxpose.xlu0.b32.cont [13/16] 0.0, 128
    %795 = vxpose.xlu0.b32.cont [14/16] 0.0, 128
    %796 = vxpose.xlu0.b32.cont [15/16] 0.0, 128
    %797 = vxpose.xlu0.b32.end [16/16] 0.0, 128
    %v798 = vpop.trf.xlu0
    %v799 = vpop.trf.xlu0
    %v800 = vpop.trf.xlu0
    %v801 = vpop.trf.xlu0
    %v802 = vpop.trf.xlu0
    %v803 = vpop.trf.xlu0
    %v804 = vpop.trf.xlu0
    %v805 = vpop.trf.xlu0
    %v806 = vpop.trf.xlu0
    %v807 = vpop.trf.xlu0
    %v808 = vpop.trf.xlu0
    %v809 = vpop.trf.xlu0
    %v810 = vpop.trf.xlu0
    %v811 = vpop.trf.xlu0
    %v812 = vpop.trf.xlu0
    %v813 = vpop.trf.xlu0
    %814 = vset.pattern.permute.xlu0 44
    %815 = vperm.xlu0 %814, %v220
    %v816 = vpop.permute.xlu0 %815
    %818 = vset.pattern.permute.xlu0 44
    %819 = vperm.xlu0 %818, %v222
    %v820 = vpop.permute.xlu0 %819
    %v822 = vperm.slane %v798, 0
    %v823 = vadd.f32 %v816, %v822
    %v824 = vadd.f32 %v820, %v822
    %v825 = vmul.f32 %v823, 0.2
    %v826 = vmul.f32 %v824, 0.2
    %v827 = vmax.f32 %v823, %v825
    %v828 = vmax.f32 %v824, %v826
    %v829 = vadd.f32 %v827, %v138
    %v830 = vadd.f32 %v828, %v139
    %v831 = vsel %vm128, %v829, -inf
    %832 = vmax.xlane.f32.xlu0 %v831
    %v833 = vpop.xlane.xlu0 %832
    %v834 = vsel %vm143, %v830, -inf
    %835 = vmax.xlane.f32.xlu0 %v834
    %v836 = vpop.xlane.xlu0 %835
    %v837 = vsub.f32 %v829, %v833
    %v838 = vsub.f32 %v830, %v836
    %v839 = vmul.f32 %v837, 1.442695
    %v840 = vpow.pop %v839
    %v841 = vmul.f32 %v838, 1.442695
    %v842 = vpow.pop %v841
    %v843 = vsel %vm128, %v840, 0.0
    %844 = vadd.xlane.f32.xlu0 %v843
    %v845 = vpop.xlane.xlu0 %844
    %v846 = vsel %vm143, %v842, 0.0
    %847 = vadd.xlane.f32.xlu0 %v846
    %v848 = vpop.xlane.xlu0 %847
    %v849 = vrcp.pop %v845
    %v850 = vrcp.pop %v848
    %v851 = vpack.c.bf16 %v842, %v840
    %v853 = vsel %vm128, %v851, 0
    %855 = vmatpush.bf16.msra.mxu0 0
    %856 = vmatpush.bf16.msra.mxu0 0
    %857 = vmatpush.bf16.msra.mxu0 0
    %858 = vmatpush.bf16.msra.mxu0 0
    %859 = vmatpush.bf16.msra.mxu0 0
    %860 = vmatpush.bf16.msra.mxu0 0
    %861 = vmatpush.bf16.msra.mxu0 0
    %862 = vmatpush.bf16.msra.mxu0 %v617
    %863 = vmatmul.bf16.gmra.mxu0 %v853
    %v864 = vpop.f32.mrf.mxu0
    %v865 = vadd.f32 0.0, %v864
    %v866 = vpop.f32.mrf.mxu0
    %v867 = vadd.f32 0.0, %v866
    %868 = vdwg.mxu0
    %v869 = vmul.f32 %v865, %v849
    %v870 = vmul.f32 %v867, %v850
    %871 = vset.pattern.permute.xlu0 45
    %872 = vperm.xlu0 %871, %v220
    %v873 = vpop.permute.xlu0 %872
    %875 = vset.pattern.permute.xlu0 45
    %876 = vperm.xlu0 %875, %v222
    %v877 = vpop.permute.xlu0 %876
    %v879 = vperm.slane %v798, 1
    %v880 = vadd.f32 %v873, %v879
    %v881 = vadd.f32 %v877, %v879
    %v882 = vmul.f32 %v880, 0.2
    %v883 = vmul.f32 %v881, 0.2
    %v884 = vmax.f32 %v880, %v882
    %v885 = vmax.f32 %v881, %v883
    %v886 = vadd.f32 %v884, %v138
    %v887 = vadd.f32 %v885, %v139
    %v888 = vsel %vm128, %v886, -inf
    %889 = vmax.xlane.f32.xlu0 %v888
    %v890 = vpop.xlane.xlu0 %889
    %v891 = vsel %vm143, %v887, -inf
    %892 = vmax.xlane.f32.xlu0 %v891
    %v893 = vpop.xlane.xlu0 %892
    %v894 = vsub.f32 %v886, %v890
    %v895 = vsub.f32 %v887, %v893
    %v896 = vmul.f32 %v894, 1.442695
    %v897 = vpow.pop %v896
    %v898 = vmul.f32 %v895, 1.442695
    %v899 = vpow.pop %v898
    %v900 = vsel %vm128, %v897, 0.0
    %901 = vadd.xlane.f32.xlu0 %v900
    %v902 = vpop.xlane.xlu0 %901
    %v903 = vsel %vm143, %v899, 0.0
    %904 = vadd.xlane.f32.xlu0 %v903
    %v905 = vpop.xlane.xlu0 %904
    %v906 = vrcp.pop %v902
    %v907 = vrcp.pop %v905
    %v908 = vpack.c.bf16 %v899, %v897
    %v910 = vsel %vm128, %v908, 0
    %912 = vmatpush.bf16.msra.mxu0 0
    %913 = vmatpush.bf16.msra.mxu0 0
    %914 = vmatpush.bf16.msra.mxu0 0
    %915 = vmatpush.bf16.msra.mxu0 0
    %916 = vmatpush.bf16.msra.mxu0 0
    %917 = vmatpush.bf16.msra.mxu0 0
    %918 = vmatpush.bf16.msra.mxu0 0
    %919 = vmatpush.bf16.msra.mxu0 %v659
    %920 = vmatmul.bf16.gmra.mxu0 %v910
    %v921 = vpop.f32.mrf.mxu0
    %v922 = vadd.f32 0.0, %v921
    %v923 = vpop.f32.mrf.mxu0
    %v924 = vadd.f32 0.0, %v923
    %925 = vdwg.mxu0
    %v926 = vmul.f32 %v922, %v906
    %v927 = vmul.f32 %v924, %v907
    %928 = vset.pattern.permute.xlu0 46
    %929 = vperm.xlu0 %928, %v220
    %v930 = vpop.permute.xlu0 %929
    %932 = vset.pattern.permute.xlu0 46
    %933 = vperm.xlu0 %932, %v222
    %v934 = vpop.permute.xlu0 %933
    %v936 = vperm.slane %v798, 2
    %v937 = vadd.f32 %v930, %v936
    %v938 = vadd.f32 %v934, %v936
    %v939 = vmul.f32 %v937, 0.2
    %v940 = vmul.f32 %v938, 0.2
    %v941 = vmax.f32 %v937, %v939
    %v942 = vmax.f32 %v938, %v940
    %v943 = vadd.f32 %v941, %v138
    %v944 = vadd.f32 %v942, %v139
    %v945 = vsel %vm128, %v943, -inf
    %946 = vmax.xlane.f32.xlu0 %v945
    %v947 = vpop.xlane.xlu0 %946
    %v948 = vsel %vm143, %v944, -inf
    %949 = vmax.xlane.f32.xlu0 %v948
    %v950 = vpop.xlane.xlu0 %949
    %v951 = vsub.f32 %v943, %v947
    %v952 = vsub.f32 %v944, %v950
    %v953 = vmul.f32 %v951, 1.442695
    %v954 = vpow.pop %v953
    %v955 = vmul.f32 %v952, 1.442695
    %v956 = vpow.pop %v955
    %v957 = vsel %vm128, %v954, 0.0
    %958 = vadd.xlane.f32.xlu0 %v957
    %v959 = vpop.xlane.xlu0 %958
    %v960 = vsel %vm143, %v956, 0.0
    %961 = vadd.xlane.f32.xlu0 %v960
    %v962 = vpop.xlane.xlu0 %961
    %v963 = vrcp.pop %v959
    %v964 = vrcp.pop %v962
    %v965 = vpack.c.bf16 %v956, %v954
    %v967 = vsel %vm128, %v965, 0
    %969 = vmatpush.bf16.msra.mxu0 0
    %970 = vmatpush.bf16.msra.mxu0 0
    %971 = vmatpush.bf16.msra.mxu0 0
    %972 = vmatpush.bf16.msra.mxu0 0
    %973 = vmatpush.bf16.msra.mxu0 0
    %974 = vmatpush.bf16.msra.mxu0 0
    %975 = vmatpush.bf16.msra.mxu0 0
    %976 = vmatpush.bf16.msra.mxu0 %v701
    %977 = vmatmul.bf16.gmra.mxu0 %v967
    %v978 = vpop.f32.mrf.mxu0
    %v979 = vadd.f32 0.0, %v978
    %v980 = vpop.f32.mrf.mxu0
    %v981 = vadd.f32 0.0, %v980
    %982 = vdwg.mxu0
    %v983 = vmul.f32 %v979, %v963
    %v984 = vmul.f32 %v981, %v964
    %985 = vset.pattern.permute.xlu0 47
    %986 = vperm.xlu0 %985, %v220
    %v987 = vpop.permute.xlu0 %986
    %989 = vset.pattern.permute.xlu0 47
    %990 = vperm.xlu0 %989, %v222
    %v991 = vpop.permute.xlu0 %990
    %v993 = vperm.slane %v798, 3
    %v994 = vadd.f32 %v987, %v993
    %v995 = vadd.f32 %v991, %v993
    %v996 = vmul.f32 %v994, 0.2
    %v997 = vmul.f32 %v995, 0.2
    %v998 = vmax.f32 %v994, %v996
    %v999 = vmax.f32 %v995, %v997
    %v1000 = vadd.f32 %v998, %v138
    %v1001 = vadd.f32 %v999, %v139
    %v1002 = vsel %vm128, %v1000, -inf
    %1003 = vmax.xlane.f32.xlu0 %v1002
    %v1004 = vpop.xlane.xlu0 %1003
    %v1005 = vsel %vm143, %v1001, -inf
    %1006 = vmax.xlane.f32.xlu0 %v1005
    %v1007 = vpop.xlane.xlu0 %1006
    %v1008 = vsub.f32 %v1000, %v1004
    %v1009 = vsub.f32 %v1001, %v1007
    %v1010 = vmul.f32 %v1008, 1.442695
    %v1011 = vpow.pop %v1010
    %v1012 = vmul.f32 %v1009, 1.442695
    %v1013 = vpow.pop %v1012
    %v1014 = vsel %vm128, %v1011, 0.0
    %1015 = vadd.xlane.f32.xlu0 %v1014
    %v1016 = vpop.xlane.xlu0 %1015
    %v1017 = vsel %vm143, %v1013, 0.0
    %1018 = vadd.xlane.f32.xlu0 %v1017
    %v1019 = vpop.xlane.xlu0 %1018
    %v1020 = vrcp.pop %v1016
    %v1021 = vrcp.pop %v1019
    %v1022 = vpack.c.bf16 %v1013, %v1011
    %v1024 = vsel %vm128, %v1022, 0
    %1026 = vmatpush.bf16.msra.mxu0 0
    %1027 = vmatpush.bf16.msra.mxu0 0
    %1028 = vmatpush.bf16.msra.mxu0 0
    %1029 = vmatpush.bf16.msra.mxu0 0
    %1030 = vmatpush.bf16.msra.mxu0 0
    %1031 = vmatpush.bf16.msra.mxu0 0
    %1032 = vmatpush.bf16.msra.mxu0 0
    %1033 = vmatpush.bf16.msra.mxu0 %v743
    %1034 = vmatmul.bf16.gmra.mxu0 %v1024
    %v1035 = vpop.f32.mrf.mxu0
    %v1036 = vadd.f32 0.0, %v1035
    %v1037 = vpop.f32.mrf.mxu0
    %v1038 = vadd.f32 0.0, %v1037
    %1039 = vdwg.mxu0
    %v1040 = vmul.f32 %v1036, %v1020
    %v1041 = vmul.f32 %v1038, %v1021
    %1044 = vrot.lane.b32.xlu0 %v926, 8
    %v1045 = vpop.permute.xlu0 %1044
    %1046 = vrot.lane.b32.xlu0 %v927, 8
    %v1047 = vpop.permute.xlu0 %1046
    %1052 = vrot.lane.b32.xlu0 %v983, 16
    %v1053 = vpop.permute.xlu0 %1052
    %1054 = vrot.lane.b32.xlu0 %v984, 16
    %v1055 = vpop.permute.xlu0 %1054
    %1060 = vrot.lane.b32.xlu0 %v1040, 24
    %v1061 = vpop.permute.xlu0 %1060
    %1062 = vrot.lane.b32.xlu0 %v1041, 24
    %v1063 = vpop.permute.xlu0 %1062
    %v1066 = vsel %vm113, %v869, %v1045
    %v1067 = vsel %vm113, %v870, %v1047
    %v1068 = vsel %vm176, %v1066, %v1053
    %v1069 = vsel %vm176, %v1067, %v1055
    %v1070 = vsel %vm542, %v1068, %v1061
    %v1071 = vsel %vm542, %v1069, %v1063
    %v1072 = vmax.f32 %v1070, 0.0
    %v1073 = vmax.f32 %v1071, 0.0
    %v1074 = vmul.f32 %v1072, %v149
    %v1075 = vmul.f32 %v1073, %v150
    %v1077 = vperm.slane %v158, 0
    %vm1079 = vcmask 261120
    %v1081 = vsel %vm1079, %v775, 0
    %1083 = vmatpush.msra.mxu0 0.0
    %1084 = vmatpush.msra.mxu0 0.0
    %1085 = vmatpush.msra.mxu0 0.0
    %1086 = vmatpush.msra.mxu0 0.0
    %1087 = vmatpush.msra.mxu0 0.0
    %1088 = vmatpush.msra.mxu0 0.0
    %1089 = vmatpush.msra.mxu0 0.0
    %1090 = vmatpush.msra.mxu0 0.0
    %1091 = vmatpush.msra.mxu0 0.0
    %1092 = vmatpush.msra.mxu0 0.0
    %1093 = vmatpush.msra.mxu0 0.0
    %1094 = vmatpush.msra.mxu0 0.0
    %1095 = vmatpush.msra.mxu0 %v157
    %1096 = vmatpush.msra.mxu0 %v156
    %1097 = vmatpush.msra.mxu0 %v155
    %1098 = vmatpush.msra.mxu0 %v154
    %1099 = vmatmul.f32.gmra.mxu0 %v1081
    %v1100 = vpop.f32.mrf.mxu0
    %v1101 = vadd.f32 %v1077, %v1100
    %1102 = vdwg.mxu0
    %v1103 = vtanh.pop %v1101
    %v1104 = vsel %vm1079, %v1103, 0.0
    %v1105 = vrot.slane %v1104, 4
    %v1106 = vadd.f32 %v1104, %v1105
    %v1107 = vrot.slane %v1106, 2
    %v1108 = vadd.f32 %v1106, %v1107
    %v1109 = vrot.slane %v1108, 1
    %v1110 = vadd.f32 %v1108, %v1109
    %v1111 = vrcp.pop 8.0
    %v1112 = vmul.f32 8.0, %v1111
    %v1113 = vsub.f32 1.0, %v1112
    %v1114 = vmul.f32 %v1111, %v1113
    %v1115 = vadd.f32 %v1111, %v1114
    %vm1116 = vweird.f32 %v1111
    %v1117 = vsel %vm1116, %v1111, %v1115
    %v1118 = vmul.f32 %v1110, %v1117
    %v1120 = vsel %vm1079, %v1118, 0
    %1122 = vmatpush.msra.mxu0 0.0
    %1123 = vmatpush.msra.mxu0 0.0
    %1124 = vmatpush.msra.mxu0 0.0
    %1125 = vmatpush.msra.mxu0 0.0
    %1126 = vmatpush.msra.mxu0 0.0
    %1127 = vmatpush.msra.mxu0 0.0
    %1128 = vmatpush.msra.mxu0 0.0
    %1129 = vmatpush.msra.mxu0 0.0
    %1130 = vmatpush.msra.mxu0 0.0
    %1131 = vmatpush.msra.mxu0 0.0
    %1132 = vmatpush.msra.mxu0 0.0
    %1133 = vmatpush.msra.mxu0 0.0
    %1134 = vmatpush.msra.mxu0 %v162
    %1135 = vmatpush.msra.mxu0 %v161
    %1136 = vmatpush.msra.mxu0 %v160
    %1137 = vmatpush.msra.mxu0 %v159
    %1138 = vmatmul.f32.gmra.mxu0 %v1120
    %v1139 = vpop.f32.mrf.mxu0
    %v1140 = vadd.f32 0.0, %v1139
    %1141 = vdwg.mxu0
    %v1142 = vsub.f32 %v1140, %v1140
    %v1143 = vmul.f32 %v1142, 1.442695
    %v1144 = vpow.pop %v1143
    %v1145 = vrcp.pop %v1144
    %v1146 = vmul.f32 %v1144, %v1145
    %v1147 = vsub.f32 1.0, %v1146
    %v1148 = vmul.f32 %v1145, %v1147
    %v1149 = vadd.f32 %v1145, %v1148
    %vm1150 = vweird.f32 %v1144
    %vm1151 = vweird.f32 %v1145
    %vm1152 = vmor %vm1150, %vm1151
    %v1153 = vsel %vm1152, %v1145, %v1149
    %v1154 = vand.u32 2147483647, %v1144
    %vm1155 = vcmp.eq.f32.partialorder %v1154, 8.507059e+37
    %v1156 = vand.u32 %v1144, 2147483648
    %v1157 = vor.u32 1.1754944e-38, %v1156
    %v1158 = vsel %vm1155, %v1157, %v1153
    %v1159 = vmul.f32 1.0, %v1158
    %v1160 = vmul.f32 %v1144, %v1159
    %s1162 = vtos %v1160
    %v1163 = vstv %s1162
    %v1165 = vmul.f32 %v1163, %v775
    %v1167 = vsel %vm1079, %v547, 0
    %v1170 = vsel %vm1079, %v548, 0
    %1172 = vmatpush.msra.mxu0 0.0
    %1173 = vmatpush.msra.mxu0 0.0
    %1174 = vmatpush.msra.mxu0 0.0
    %1175 = vmatpush.msra.mxu0 0.0
    %1176 = vmatpush.msra.mxu0 0.0
    %1177 = vmatpush.msra.mxu0 0.0
    %1178 = vmatpush.msra.mxu0 0.0
    %1179 = vmatpush.msra.mxu0 0.0
    %1180 = vmatpush.msra.mxu0 0.0
    %1181 = vmatpush.msra.mxu0 0.0
    %1182 = vmatpush.msra.mxu0 0.0
    %1183 = vmatpush.msra.mxu0 0.0
    %1184 = vmatpush.msra.mxu0 %v157
    %1185 = vmatpush.msra.mxu0 %v156
    %1186 = vmatpush.msra.mxu0 %v155
    %1187 = vmatpush.msra.mxu0 %v154
    %1188 = vmatmul.f32.gmra.mxu0 %v1167
    %v1189 = vpop.f32.mrf.mxu0
    %v1190 = vadd.f32 %v1077, %v1189
    %1191 = vmatmul.f32.gmra.mxu0 %v1170
    %v1192 = vpop.f32.mrf.mxu0
    %v1193 = vadd.f32 %v1077, %v1192
    %1194 = vdwg.mxu0
    %v1195 = vtanh.pop %v1190
    %v1196 = vtanh.pop %v1193
    %v1197 = vsel %vm1079, %v1195, 0.0
    %vm1198 = vcmask 257024
    %v1199 = vsel %vm1198, %v1196, 0.0
    %v1200 = vadd.f32 %v1197, %v1199
    %v1201 = vrot.slane %v1200, 4
    %v1202 = vadd.f32 %v1200, %v1201
    %v1203 = vrot.slane %v1202, 2
    %v1204 = vadd.f32 %v1202, %v1203
    %v1205 = vrot.slane %v1204, 1
    %v1206 = vadd.f32 %v1204, %v1205
    %v1207 = vrcp.pop 12.0
    %v1208 = vmul.f32 12.0, %v1207
    %v1209 = vsub.f32 1.0, %v1208
    %v1210 = vmul.f32 %v1207, %v1209
    %v1211 = vadd.f32 %v1207, %v1210
    %vm1212 = vweird.f32 %v1207
    %v1213 = vsel %vm1212, %v1207, %v1211
    %v1214 = vmul.f32 %v1206, %v1213
    %v1216 = vsel %vm1079, %v1214, 0
    %1218 = vmatpush.msra.mxu0 0.0
    %1219 = vmatpush.msra.mxu0 0.0
    %1220 = vmatpush.msra.mxu0 0.0
    %1221 = vmatpush.msra.mxu0 0.0
    %1222 = vmatpush.msra.mxu0 0.0
    %1223 = vmatpush.msra.mxu0 0.0
    %1224 = vmatpush.msra.mxu0 0.0
    %1225 = vmatpush.msra.mxu0 0.0
    %1226 = vmatpush.msra.mxu0 0.0
    %1227 = vmatpush.msra.mxu0 0.0
    %1228 = vmatpush.msra.mxu0 0.0
    %1229 = vmatpush.msra.mxu0 0.0
    %1230 = vmatpush.msra.mxu0 %v162
    %1231 = vmatpush.msra.mxu0 %v161
    %1232 = vmatpush.msra.mxu0 %v160
    %1233 = vmatpush.msra.mxu0 %v159
    %1234 = vmatmul.f32.gmra.mxu0 %v1216
    %v1235 = vpop.f32.mrf.mxu0
    %v1236 = vadd.f32 0.0, %v1235
    %1237 = vdwg.mxu0
    %v1239 = vsel %vm1079, %v1074, 0
    %v1242 = vsel %vm1079, %v1075, 0
    %1244 = vmatpush.msra.mxu0 0.0
    %1245 = vmatpush.msra.mxu0 0.0
    %1246 = vmatpush.msra.mxu0 0.0
    %1247 = vmatpush.msra.mxu0 0.0
    %1248 = vmatpush.msra.mxu0 0.0
    %1249 = vmatpush.msra.mxu0 0.0
    %1250 = vmatpush.msra.mxu0 0.0
    %1251 = vmatpush.msra.mxu0 0.0
    %1252 = vmatpush.msra.mxu0 0.0
    %1253 = vmatpush.msra.mxu0 0.0
    %1254 = vmatpush.msra.mxu0 0.0
    %1255 = vmatpush.msra.mxu0 0.0
    %1256 = vmatpush.msra.mxu0 %v157
    %1257 = vmatpush.msra.mxu0 %v156
    %1258 = vmatpush.msra.mxu0 %v155
    %1259 = vmatpush.msra.mxu0 %v154
    %1260 = vmatmul.f32.gmra.mxu0 %v1239
    %v1261 = vpop.f32.mrf.mxu0
    %v1262 = vadd.f32 %v1077, %v1261
    %1263 = vmatmul.f32.gmra.mxu0 %v1242
    %v1264 = vpop.f32.mrf.mxu0
    %v1265 = vadd.f32 %v1077, %v1264
    %1266 = vdwg.mxu0
    %v1267 = vtanh.pop %v1262
    %v1268 = vtanh.pop %v1265
    %v1269 = vsel %vm1079, %v1267, 0.0
    %v1270 = vsel %vm1198, %v1268, 0.0
    %v1271 = vadd.f32 %v1269, %v1270
    %v1272 = vrot.slane %v1271, 4
    %v1273 = vadd.f32 %v1271, %v1272
    %v1274 = vrot.slane %v1273, 2
    %v1275 = vadd.f32 %v1273, %v1274
    %v1276 = vrot.slane %v1275, 1
    %v1277 = vadd.f32 %v1275, %v1276
    %v1278 = vmul.f32 %v1277, %v1213
    %v1280 = vsel %vm1079, %v1278, 0
    %1282 = vmatpush.msra.mxu0 0.0
    %1283 = vmatpush.msra.mxu0 0.0
    %1284 = vmatpush.msra.mxu0 0.0
    %1285 = vmatpush.msra.mxu0 0.0
    %1286 = vmatpush.msra.mxu0 0.0
    %1287 = vmatpush.msra.mxu0 0.0
    %1288 = vmatpush.msra.mxu0 0.0
    %1289 = vmatpush.msra.mxu0 0.0
    %1290 = vmatpush.msra.mxu0 0.0
    %1291 = vmatpush.msra.mxu0 0.0
    %1292 = vmatpush.msra.mxu0 0.0
    %1293 = vmatpush.msra.mxu0 0.0
    %1294 = vmatpush.msra.mxu0 %v162
    %1295 = vmatpush.msra.mxu0 %v161
    %1296 = vmatpush.msra.mxu0 %v160
    %1297 = vmatpush.msra.mxu0 %v159
    %1298 = vmatmul.f32.gmra.mxu0 %v1280
    %v1299 = vpop.f32.mrf.mxu0
    %v1300 = vadd.f32 0.0, %v1299
    %1301 = vdwg.mxu0
    %v1302 = vmax.f32 %v1236, %v1300
    %v1303 = vsub.f32 %v1236, %v1302
    %v1304 = vmul.f32 %v1303, 1.442695
    %v1305 = vpow.pop %v1304
    %v1306 = vsub.f32 %v1300, %v1302
    %v1307 = vmul.f32 %v1306, 1.442695
    %v1308 = vpow.pop %v1307
    %v1309 = vadd.f32 %v1305, %v1308
    %v1310 = vrcp.pop %v1309
    %v1311 = vmul.f32 %v1309, %v1310
    %v1312 = vsub.f32 1.0, %v1311
    %v1313 = vmul.f32 %v1310, %v1312
    %v1314 = vadd.f32 %v1310, %v1313
    %vm1315 = vweird.f32 %v1309
    %vm1316 = vweird.f32 %v1310
    %vm1317 = vmor %vm1315, %vm1316
    %v1318 = vsel %vm1317, %v1310, %v1314
    %v1319 = vand.u32 2147483647, %v1309
    %vm1320 = vcmp.eq.f32.partialorder %v1319, 8.507059e+37
    %v1321 = vand.u32 %v1309, 2147483648
    %v1322 = vor.u32 1.1754944e-38, %v1321
    %v1323 = vsel %vm1320, %v1322, %v1318
    %v1324 = vmul.f32 1.0, %v1323
    %v1325 = vmul.f32 %v1305, %v1324
    %s1327 = vtos %v1325
    %v1328 = vstv %s1327
    %v1330 = vmul.f32 %v1328, %v547
    %v1331 = vmul.f32 %v1328, %v548
    %v1332 = vmul.f32 %v1308, %v1324
    %s1334 = vtos %v1332
    %v1335 = vstv %s1334
    %v1337 = vmul.f32 %v1335, %v1074
    %v1338 = vmul.f32 %v1335, %v1075
    %v1339 = vadd.f32 %v1330, %v1337
    %v1340 = vadd.f32 %v1331, %v1338
    %v1341 = vld [vmem:[%s16] sm:$0xff]
    %v1342 = vld [vmem:[%s17] sm:$0x1]
    %v1343 = vld [vmem:[%s18] sm:$0xff]
    %v1344 = vpack.c.bf16 %v1165, %v1165
    %v1345 = vld [vmem:[%s12] sm:$0xf]
    %v1346 = vld [vmem:[%s12 + $0x4] sm:$0xf]
    %v1347 = vld [vmem:[%s12 + $0x8] sm:$0xf]
    %v1348 = vld [vmem:[%s12 + $0xc] sm:$0xf]
    %v1349 = vld [vmem:[%s13] sm:$0x1]
    %v1351 = vperm.slane %v1349, 0
    %v1357 = vunpack.c.l.b16 %v1345
    %v1358 = vunpack.c.l.b16 %v1346
    %v1359 = vunpack.c.l.b16 %v1347
    %v1360 = vunpack.c.l.b16 %v1348
    %v1361 = vpack.c.b16 %v1358, %v1357
    %v1362 = vpack.c.b16 %v1360, %v1359
    %v1366 = vsel %vm1079, %v1344, 0
    %1368 = vmatpush.bf16.msra.mxu0 0
    %1369 = vmatpush.bf16.msra.mxu0 0
    %1370 = vmatpush.bf16.msra.mxu0 0
    %1371 = vmatpush.bf16.msra.mxu0 0
    %1372 = vmatpush.bf16.msra.mxu0 0
    %1373 = vmatpush.bf16.msra.mxu0 0
    %1374 = vmatpush.bf16.msra.mxu0 %v1362
    %1375 = vmatpush.bf16.msra.mxu0 %v1361
    %1376 = vmatmul.bf16.gmra.mxu0 %v1366
    %v1377 = vpop.f32.mrf.mxu0
    %v1378 = vadd.f32 %v1351, %v1377
    %v1379 = vpop.f32.mrf.mxu0
    %1380 = vdwg.mxu0
    %v1381 = vpack.c.bf16 %v1340, %v1339
    %v1382 = vld [vmem:[%s14] sm:$0xf]
    %v1383 = vld [vmem:[%s14 + $0x4] sm:$0xf]
    %v1384 = vld [vmem:[%s14 + $0x8] sm:$0xf]
    %v1385 = vld [vmem:[%s14 + $0xc] sm:$0xf]
    %v1386 = vld [vmem:[%s15] sm:$0x1]
    %v1388 = vperm.slane %v1386, 0
    %v1394 = vunpack.c.l.b16 %v1382
    %v1395 = vunpack.c.l.b16 %v1383
    %v1396 = vunpack.c.l.b16 %v1384
    %v1397 = vunpack.c.l.b16 %v1385
    %v1398 = vpack.c.b16 %v1395, %v1394
    %v1399 = vpack.c.b16 %v1397, %v1396
    %v1403 = vsel %vm1079, %v1381, 0
    %1405 = vmatpush.bf16.msra.mxu0 0
    %1406 = vmatpush.bf16.msra.mxu0 0
    %1407 = vmatpush.bf16.msra.mxu0 0
    %1408 = vmatpush.bf16.msra.mxu0 0
    %1409 = vmatpush.bf16.msra.mxu0 0
    %1410 = vmatpush.bf16.msra.mxu0 0
    %1411 = vmatpush.bf16.msra.mxu0 %v1399
    %1412 = vmatpush.bf16.msra.mxu0 %v1398
    %1413 = vmatmul.bf16.gmra.mxu0 %v1403
    %v1414 = vpop.f32.mrf.mxu0
    %v1415 = vadd.f32 %v1388, %v1414
    %v1416 = vpop.f32.mrf.mxu0
    %v1417 = vadd.f32 %v1388, %v1416
    %1418 = vdwg.mxu0
    %v1419 = vpack.c.bf16 %v1415, %v1415
    %v1420 = vpack.c.bf16 %v1417, %v1417
    %1423 = vrot.lane.b32.xlu0 %v1415, 120
    %v1424 = vpop.permute.xlu0 %1423
    %1425 = vrot.lane.b32.xlu0 %v1417, 120
    %v1426 = vpop.permute.xlu0 %1425
    %1429 = vxpose.xlu0.b32.start [1/16] %v1424, 128
    %1430 = vxpose.xlu0.b32.cont [2/16] %v1426, 128
    %1431 = vxpose.xlu0.b32.cont [3/16] 0.0, 128
    %1432 = vxpose.xlu0.b32.cont [4/16] 0.0, 128
    %1433 = vxpose.xlu0.b32.cont [5/16] 0.0, 128
    %1434 = vxpose.xlu0.b32.cont [6/16] 0.0, 128
    %1435 = vxpose.xlu0.b32.cont [7/16] 0.0, 128
    %1436 = vxpose.xlu0.b32.cont [8/16] 0.0, 128
    %1437 = vxpose.xlu0.b32.cont [9/16] 0.0, 128
    %1438 = vxpose.xlu0.b32.cont [10/16] 0.0, 128
    %1439 = vxpose.xlu0.b32.cont [11/16] 0.0, 128
    %1440 = vxpose.xlu0.b32.cont [12/16] 0.0, 128
    %1441 = vxpose.xlu0.b32.cont [13/16] 0.0, 128
    %1442 = vxpose.xlu0.b32.cont [14/16] 0.0, 128
    %1443 = vxpose.xlu0.b32.cont [15/16] 0.0, 128
    %1444 = vxpose.xlu0.b32.end [16/16] 0.0, 128
    %v1445 = vpop.trf.xlu0
    %v1446 = vpop.trf.xlu0
    %v1447 = vpop.trf.xlu0
    %v1448 = vpop.trf.xlu0
    %v1449 = vpop.trf.xlu0
    %v1450 = vpop.trf.xlu0
    %v1451 = vpop.trf.xlu0
    %v1452 = vpop.trf.xlu0
    %v1453 = vpop.trf.xlu0
    %v1454 = vpop.trf.xlu0
    %v1455 = vpop.trf.xlu0
    %v1456 = vpop.trf.xlu0
    %v1457 = vpop.trf.xlu0
    %v1458 = vpop.trf.xlu0
    %v1459 = vpop.trf.xlu0
    %v1460 = vpop.trf.xlu0
    %1462 = vset.pattern.permute.xlu0 12
    %1463 = vperm.xlu0 %1462, %v1378
    %v1464 = vpop.permute.xlu0 %1463
    %v1466 = vperm.slane %v1445, 0
    %v1467 = vadd.f32 %v1464, %v1466
    %v1468 = vmul.f32 %v1467, 0.2
    %v1469 = vmax.f32 %v1467, %v1468
    %v1470 = vadd.f32 %v1469, %v127
    %v1471 = vsel %vm128, %v1470, -inf
    %1472 = vmax.xlane.f32.xlu0 %v1471
    %v1473 = vpop.xlane.xlu0 %1472
    %v1474 = vsub.f32 %v1470, %v1473
    %v1475 = vmul.f32 %v1474, 1.442695
    %v1476 = vpow.pop %v1475
    %v1477 = vsel %vm128, %v1476, 0.0
    %1478 = vadd.xlane.f32.xlu0 %v1477
    %v1479 = vpop.xlane.xlu0 %1478
    %v1480 = vrcp.pop %v1479
    %v1481 = vpack.c.bf16 %v1476, %v1476
    %v1484 = vunpack.c.l.b16 %v1419
    %v1485 = vunpack.c.l.b16 %v1420
    %v1486 = vpack.c.b16 %v1485, %v1484
    %v1488 = vsel %vm128, %v1481, 0
    %v1491 = vsel %vm615, %v1486, 0
    %1493 = vmatpush.bf16.msra.mxu0 0
    %1494 = vmatpush.bf16.msra.mxu0 0
    %1495 = vmatpush.bf16.msra.mxu0 0
    %1496 = vmatpush.bf16.msra.mxu0 0
    %1497 = vmatpush.bf16.msra.mxu0 0
    %1498 = vmatpush.bf16.msra.mxu0 0
    %1499 = vmatpush.bf16.msra.mxu0 0
    %1500 = vmatpush.bf16.msra.mxu0 %v1491
    %1501 = vmatmul.bf16.gmra.mxu0 %v1488
    %v1502 = vpop.f32.mrf.mxu0
    %v1503 = vadd.f32 0.0, %v1502
    %v1504 = vpop.f32.mrf.mxu0
    %1505 = vdwg.mxu0
    %v1506 = vmul.f32 %v1503, %v1480
    %1507 = vset.pattern.permute.xlu0 13
    %1508 = vperm.xlu0 %1507, %v1378
    %v1509 = vpop.permute.xlu0 %1508
    %v1511 = vperm.slane %v1445, 1
    %v1512 = vadd.f32 %v1509, %v1511
    %v1513 = vmul.f32 %v1512, 0.2
    %v1514 = vmax.f32 %v1512, %v1513
    %v1515 = vadd.f32 %v1514, %v127
    %v1516 = vsel %vm128, %v1515, -inf
    %1517 = vmax.xlane.f32.xlu0 %v1516
    %v1518 = vpop.xlane.xlu0 %1517
    %v1519 = vsub.f32 %v1515, %v1518
    %v1520 = vmul.f32 %v1519, 1.442695
    %v1521 = vpow.pop %v1520
    %v1522 = vsel %vm128, %v1521, 0.0
    %1523 = vadd.xlane.f32.xlu0 %v1522
    %v1524 = vpop.xlane.xlu0 %1523
    %v1525 = vrcp.pop %v1524
    %v1526 = vpack.c.bf16 %v1521, %v1521
    %1527 = vrot.lane.b32.xlu0 %v1486, 126
    %v1528 = vpop.permute.xlu0 %1527
    %v1530 = vsel %vm128, %v1526, 0
    %v1533 = vsel %vm615, %v1528, 0
    %1535 = vmatpush.bf16.msra.mxu0 0
    %1536 = vmatpush.bf16.msra.mxu0 0
    %1537 = vmatpush.bf16.msra.mxu0 0
    %1538 = vmatpush.bf16.msra.mxu0 0
    %1539 = vmatpush.bf16.msra.mxu0 0
    %1540 = vmatpush.bf16.msra.mxu0 0
    %1541 = vmatpush.bf16.msra.mxu0 0
    %1542 = vmatpush.bf16.msra.mxu0 %v1533
    %1543 = vmatmul.bf16.gmra.mxu0 %v1530
    %v1544 = vpop.f32.mrf.mxu0
    %v1545 = vadd.f32 0.0, %v1544
    %v1546 = vpop.f32.mrf.mxu0
    %1547 = vdwg.mxu0
    %v1548 = vmul.f32 %v1545, %v1525
    %1549 = vset.pattern.permute.xlu0 14
    %1550 = vperm.xlu0 %1549, %v1378
    %v1551 = vpop.permute.xlu0 %1550
    %v1553 = vperm.slane %v1445, 2
    %v1554 = vadd.f32 %v1551, %v1553
    %v1555 = vmul.f32 %v1554, 0.2
    %v1556 = vmax.f32 %v1554, %v1555
    %v1557 = vadd.f32 %v1556, %v127
    %v1558 = vsel %vm128, %v1557, -inf
    %1559 = vmax.xlane.f32.xlu0 %v1558
    %v1560 = vpop.xlane.xlu0 %1559
    %v1561 = vsub.f32 %v1557, %v1560
    %v1562 = vmul.f32 %v1561, 1.442695
    %v1563 = vpow.pop %v1562
    %v1564 = vsel %vm128, %v1563, 0.0
    %1565 = vadd.xlane.f32.xlu0 %v1564
    %v1566 = vpop.xlane.xlu0 %1565
    %v1567 = vrcp.pop %v1566
    %v1568 = vpack.c.bf16 %v1563, %v1563
    %1569 = vrot.lane.b32.xlu0 %v1486, 124
    %v1570 = vpop.permute.xlu0 %1569
    %v1572 = vsel %vm128, %v1568, 0
    %v1575 = vsel %vm615, %v1570, 0
    %1577 = vmatpush.bf16.msra.mxu0 0
    %1578 = vmatpush.bf16.msra.mxu0 0
    %1579 = vmatpush.bf16.msra.mxu0 0
    %1580 = vmatpush.bf16.msra.mxu0 0
    %1581 = vmatpush.bf16.msra.mxu0 0
    %1582 = vmatpush.bf16.msra.mxu0 0
    %1583 = vmatpush.bf16.msra.mxu0 0
    %1584 = vmatpush.bf16.msra.mxu0 %v1575
    %1585 = vmatmul.bf16.gmra.mxu0 %v1572
    %v1586 = vpop.f32.mrf.mxu0
    %v1587 = vadd.f32 0.0, %v1586
    %v1588 = vpop.f32.mrf.mxu0
    %1589 = vdwg.mxu0
    %v1590 = vmul.f32 %v1587, %v1567
    %1591 = vset.pattern.permute.xlu0 15
    %1592 = vperm.xlu0 %1591, %v1378
    %v1593 = vpop.permute.xlu0 %1592
    %v1595 = vperm.slane %v1445, 3
    %v1596 = vadd.f32 %v1593, %v1595
    %v1597 = vmul.f32 %v1596, 0.2
    %v1598 = vmax.f32 %v1596, %v1597
    %v1599 = vadd.f32 %v1598, %v127
    %v1600 = vsel %vm128, %v1599, -inf
    %1601 = vmax.xlane.f32.xlu0 %v1600
    %v1602 = vpop.xlane.xlu0 %1601
    %v1603 = vsub.f32 %v1599, %v1602
    %v1604 = vmul.f32 %v1603, 1.442695
    %v1605 = vpow.pop %v1604
    %v1606 = vsel %vm128, %v1605, 0.0
    %1607 = vadd.xlane.f32.xlu0 %v1606
    %v1608 = vpop.xlane.xlu0 %1607
    %v1609 = vrcp.pop %v1608
    %v1610 = vpack.c.bf16 %v1605, %v1605
    %1611 = vrot.lane.b32.xlu0 %v1486, 122
    %v1612 = vpop.permute.xlu0 %1611
    %v1614 = vsel %vm128, %v1610, 0
    %v1617 = vsel %vm615, %v1612, 0
    %1619 = vmatpush.bf16.msra.mxu0 0
    %1620 = vmatpush.bf16.msra.mxu0 0
    %1621 = vmatpush.bf16.msra.mxu0 0
    %1622 = vmatpush.bf16.msra.mxu0 0
    %1623 = vmatpush.bf16.msra.mxu0 0
    %1624 = vmatpush.bf16.msra.mxu0 0
    %1625 = vmatpush.bf16.msra.mxu0 0
    %1626 = vmatpush.bf16.msra.mxu0 %v1617
    %1627 = vmatmul.bf16.gmra.mxu0 %v1614
    %v1628 = vpop.f32.mrf.mxu0
    %v1629 = vadd.f32 0.0, %v1628
    %v1630 = vpop.f32.mrf.mxu0
    %1631 = vdwg.mxu0
    %v1632 = vmul.f32 %v1629, %v1609
    %1634 = vrot.lane.b32.xlu0 %v1548, 2
    %v1635 = vpop.permute.xlu0 %1634
    %1638 = vrot.lane.b32.xlu0 %v1590, 4
    %v1639 = vpop.permute.xlu0 %1638
    %1642 = vrot.lane.b32.xlu0 %v1632, 6
    %v1643 = vpop.permute.xlu0 %1642
    %vm1645 = vcmask 15360
    %v1646 = vsel %vm1645, %v1506, %v1635
    %vm1647 = vcmask 31744
    %v1648 = vsel %vm1647, %v1646, %v1639
    %vm1649 = vcmask 48128
    %v1650 = vsel %vm1649, %v1648, %v1643
    %v1651 = vmax.f32 %v1650, 0.0
    %v1652 = vmul.f32 %v1651, %v133
    %v1654 = vperm.slane %v1342, 0
    %v1657 = vsel %vm113, %v1652, 0
    %1659 = vmatpush.msra.mxu0 0.0
    %1660 = vmatpush.msra.mxu0 0.0
    %1661 = vmatpush.msra.mxu0 0.0
    %1662 = vmatpush.msra.mxu0 0.0
    %1663 = vmatpush.msra.mxu0 0.0
    %1664 = vmatpush.msra.mxu0 0.0
    %1665 = vmatpush.msra.mxu0 0.0
    %1666 = vmatpush.msra.mxu0 0.0
    %1667 = vmatpush.msra.mxu0 0.0
    %1668 = vmatpush.msra.mxu0 0.0
    %1669 = vmatpush.msra.mxu0 0.0
    %1670 = vmatpush.msra.mxu0 0.0
    %1671 = vmatpush.msra.mxu0 0.0
    %1672 = vmatpush.msra.mxu0 0.0
    %1673 = vmatpush.msra.mxu0 0.0
    %1674 = vmatpush.msra.mxu0 %v1341
    %1675 = vmatmul.f32.gmra.mxu0 %v1657
    %v1676 = vpop.f32.mrf.mxu0
    %v1677 = vadd.f32 %v1654, %v1676
    %1678 = vdwg.mxu0
    %v1679 = vtanh.pop %v1677
    %v1680 = vsel %vm113, %v1679, 0.0
    %v1681 = vrot.slane %v1680, 4
    %v1682 = vadd.f32 %v1680, %v1681
    %v1683 = vrot.slane %v1682, 2
    %v1684 = vadd.f32 %v1682, %v1683
    %v1685 = vrot.slane %v1684, 1
    %v1686 = vadd.f32 %v1684, %v1685
    %v1687 = vmul.f32 %v1686, %v1117
    %v1689 = vsel %vm113, %v1687, 0
    %1691 = vmatpush.msra.mxu0 0.0
    %1692 = vmatpush.msra.mxu0 0.0
    %1693 = vmatpush.msra.mxu0 0.0
    %1694 = vmatpush.msra.mxu0 0.0
    %1695 = vmatpush.msra.mxu0 0.0
    %1696 = vmatpush.msra.mxu0 0.0
    %1697 = vmatpush.msra.mxu0 0.0
    %1698 = vmatpush.msra.mxu0 0.0
    %1699 = vmatpush.msra.mxu0 0.0
    %1700 = vmatpush.msra.mxu0 0.0
    %1701 = vmatpush.msra.mxu0 0.0
    %1702 = vmatpush.msra.mxu0 0.0
    %1703 = vmatpush.msra.mxu0 0.0
    %1704 = vmatpush.msra.mxu0 0.0
    %1705 = vmatpush.msra.mxu0 0.0
    %1706 = vmatpush.msra.mxu0 %v1343
    %1707 = vmatmul.f32.gmra.mxu0 %v1689
    %v1708 = vpop.f32.mrf.mxu0
    %v1709 = vadd.f32 0.0, %v1708
    %1710 = vdwg.mxu0
    %v1711 = vsub.f32 %v1709, %v1709
    %v1712 = vmul.f32 %v1711, 1.442695
    %v1713 = vpow.pop %v1712
    %v1714 = vrcp.pop %v1713
    %v1715 = vmul.f32 %v1713, %v1714
    %v1716 = vsub.f32 1.0, %v1715
    %v1717 = vmul.f32 %v1714, %v1716
    %v1718 = vadd.f32 %v1714, %v1717
    %vm1719 = vweird.f32 %v1713
    %vm1720 = vweird.f32 %v1714
    %vm1721 = vmor %vm1719, %vm1720
    %v1722 = vsel %vm1721, %v1714, %v1718
    %v1723 = vand.u32 2147483647, %v1713
    %vm1724 = vcmp.eq.f32.partialorder %v1723, 8.507059e+37
    %v1725 = vand.u32 %v1713, 2147483648
    %v1726 = vor.u32 1.1754944e-38, %v1725
    %v1727 = vsel %vm1724, %v1726, %v1722
    %v1728 = vmul.f32 1.0, %v1727
    %v1729 = vmul.f32 %v1713, %v1728
    %s1731 = vtos %v1729
    %v1732 = vstv %s1731
    %v1734 = vmul.f32 %v1732, %v1652
    %1735 = vst.msk [vmem:[#allocation8] sm:$0xff] %vm113, %v1734
    // Predicated region
    $region90: #{tpu_custom_call.1} parent=1 // pred_check
      _
    $region91: #{tpu_custom_call.1} parent=1 // pred_check_branch
      %1737 = sbr.rel (0) target = $region93
    $region92: #{tpu_custom_call.1} parent=1 // pred_region
      %1739 = vsyncadd [#allocation4], 0
      %s1741 = sshll.u32 [#allocation8], 4
      %s1742 = int_to_ptr.vmem [resolvable:$true] %s1741
      %s1743 = sshll.u32 %s19, 4
      %s1744 = int_to_ptr.hbm [resolvable:$true] %s1743
      %1746 = dma.vmem_to_hbm [thread:$0]  %s1742, 128, %s1744, [#allocation4]
    $region93: #{tpu_custom_call.1} parent=1 // pred_fallthru
      _
    // Predicated region
    $region94: #{tpu_custom_call.1} parent=1 // pred_check
      _
    $region95: #{tpu_custom_call.1} parent=1 // pred_check_branch
      %1748 = sbr.rel (0) target = $region97
    $region96: #{tpu_custom_call.1} parent=1 // pred_region
      %1750 = dma.done [#allocation4], 128
    $region97: #{tpu_custom_call.1} parent=1 // pred_fallthru
      _
    %1751 = vsyncpa [#allocation3], 1
    %1752 = vsyncpa [#allocation6], 1
    %1753 = vsyncpa [#allocation4], 1

</llo_original>
